<compile_context>
chip_gen: v6e
topology: v6e:2x2x1
jax: 0.10.0
libtpu: 0.0.40
codegen_flags: <defaults>
</compile_context>

<pallas_src>
import jax
import jax.numpy as jnp
from jax.experimental import pallas as pl
from jax.experimental.pallas import tpu as pltpu  # noqa: F401  (TPU backend import)


# ---------------------------------------------------------------------------
# Fused split kernel: projections + softmax + sigmoid + sampling + e-update
#                     + variance + log-probabilities for all depth scales.
# ---------------------------------------------------------------------------

def _split_fused_kernel(x_ref, m_ref, mrow_ref, mcol_ref, rand_ref, wphi_ref, ws_ref,
                        phi_ref, inpn_ref, probs_ref, e_ref, var_ref, lp_ref):
    B, n, D = x_ref.shape
    depth = rand_ref.shape[0]

    x = x_ref[...]                       # (B, n, D)
    m = m_ref[...]                       # (B, n)
    m_row = mrow_ref[...]                # (B, n, 1)   (prepared in wrapper)
    m_col = mcol_ref[...]                # (B, 1, n)   (prepared in wrapper)
    lengths = jnp.maximum(jnp.sum(m, axis=1, keepdims=True), 1.0)   # (B, 1)

    # --- Split stand-in, hoisted out of the scale loop (Phi / input_n do not
    #     depend on e or scale in this stand-in) ------------------------------
    w_phi = jnp.broadcast_to(wphi_ref[...][None], (B, D, D))          # (B, D, D)
    h = jnp.einsum('bnd,bde->bne', x, w_phi,
                   preferred_element_type=jnp.float32)                # (B, n, D)
    s = jnp.einsum('bnd,bmd->bnm', h, x,
                   preferred_element_type=jnp.float32)                # (B, n, n)
    s = s + (m_col - 1.0) * 1e9                                       # mask columns
    s = s - jnp.max(s, axis=-1, keepdims=True)
    p = jnp.exp(s)
    phi = (p / jnp.sum(p, axis=-1, keepdims=True)) * m_row            # mask rows too
    inp_n = jnp.einsum('bnm,bmd->bnd', phi, x,
                       preferred_element_type=jnp.float32)            # (B, n, D)
    base_logit = jnp.sum(inp_n * ws_ref[...], axis=-1)                # (B, n); w_s as (1,1,D)

    phi_ref[...] = phi
    inpn_ref[...] = inp_n

    # --- per-scale sampling / variance / log-probabilities -------------------
    e = jnp.zeros((B, n), jnp.float32)
    var = jnp.zeros((1, 1), jnp.float32)
    for scale in range(depth):                                        # static unroll
        logits = base_logit + 0.1 * e + 0.1 * float(scale)
        probs = jax.nn.sigmoid(logits) * m                            # (B, n)
        sample = (probs > rand_ref[scale]).astype(jnp.float32)
        e = 2.0 * e + sample

        # compute_variance (stable masked form, averaged over batch)
        mean = jnp.sum(probs, axis=1, keepdims=True) / lengths        # (B, 1)
        dev = (probs - mean) * m
        v_b = jnp.sum(dev * dev, axis=1, keepdims=True) / lengths     # (B, 1)
        var = var + jnp.sum(v_b, axis=0, keepdims=True) / float(B)

        # log_probabilities for this scale
        pa = probs * sample + (1.0 - probs) * (1.0 - sample)
        lg = jnp.where(m > 0.0, jnp.log(pa + 1e-6), 0.0)
        lp = jnp.sum(lg, axis=1, keepdims=True) / lengths             # (B, 1)

        probs_ref[scale] = probs
        lp_ref[scale] = lp

    e_ref[...] = e * m + (1.0 - m) * 1e6
    var_ref[...] = var


def fwd_split(params, x, depth, key):
    """Whole split stage (all depth scales) in a single Pallas launch."""
    B, n, D = x.shape
    mask = (x[:, :, 0] >= 0).astype(jnp.float32)                      # (B, n)
    rand = jax.random.uniform(key, (depth, B, n), dtype=jnp.float32)

    out_shapes = (
        jax.ShapeDtypeStruct((B, n, n), jnp.float32),      # Phi (scale-invariant)
        jax.ShapeDtypeStruct((B, n, D), jnp.float32),      # input_n (scale-invariant)
        jax.ShapeDtypeStruct((depth, B, n), jnp.float32),  # probs per scale
        jax.ShapeDtypeStruct((B, n), jnp.float32),         # e
        jax.ShapeDtypeStruct((1, 1), jnp.float32),         # accumulated variance
        jax.ShapeDtypeStruct((depth, B, 1), jnp.float32),  # log-probs per scale
    )
    flops = 6 * B * n * n * D + depth * 12 * B * n
    phi, inp_n, probs_all, e, var, lp_all = pl.pallas_call(
        _split_fused_kernel,
        out_shape=out_shapes,
        cost_estimate=pl.CostEstimate(
            flops=int(flops),
            transcendentals=int(B * n * (n + 2 * depth)),
            bytes_accessed=int(4 * (x.size + rand.size + B * n * (n + D + 4)))),
    )(x, mask, mask[:, :, None], mask[:, None, :], rand,
      params["W_phi"], params["w_s"].reshape(1, 1, D))

    Phis = [phi for _ in range(depth)]          # stand-in Phi is scale-invariant
    Inputs_N = [inp_n for _ in range(depth)]
    Bs = [probs_all[s] for s in range(depth)]
    log_probs = [lp_all[s] for s in range(depth)]
    return var, Phis, Bs, Inputs_N, e, log_probs


# ---------------------------------------------------------------------------
# Merge kernel: pointer-style attention over the whole batch in one launch.
# ---------------------------------------------------------------------------

def _merge_kernel(xs_ref, bias_ref, wq_ref, wk_ref, out_ref):
    B, n1, D = xs_ref.shape
    H = wq_ref.shape[1]
    xs = xs_ref[...]                                                  # (B, n+1, D)
    wq = jnp.broadcast_to(wq_ref[...][None], (B, D, H))
    wk = jnp.broadcast_to(wk_ref[...][None], (B, D, H))
    q = jnp.einsum('bnd,bdh->bnh', xs, wq, preferred_element_type=jnp.float32)
    k = jnp.einsum('bnd,bdh->bnh', xs, wk, preferred_element_type=jnp.float32)
    scores = jnp.einsum('bqh,bkh->bqk', q, k, preferred_element_type=jnp.float32)
    scores = scores + bias_ref[...]                                   # padded phi bias
    scores = scores - jnp.max(scores, axis=-1, keepdims=True)
    p = jnp.exp(scores)
    out_ref[...] = p / jnp.sum(p, axis=-1, keepdims=True)


def merge_forward(params, input_scale, phis):
    """Stand-in for Merge(input_scale, phis): returns (B, n, n+1) row-stochastic.

    TODO(synk): external `Merge` module replaced by a deterministic attention
    stand-in with identical I/O shapes.
    """
    B, n1, D = input_scale.shape
    H = params["Wq"].shape[1]
    # Layout plumbing in the wrapper (free): pad the phi bias to the full
    # (n+1, n+1) score matrix so the kernel needs no concats or slices.
    bias = jnp.pad(phis, ((0, 0), (1, 0), (1, 0)))
    full = pl.pallas_call(
        _merge_kernel,
        out_shape=jax.ShapeDtypeStruct((B, n1, n1), jnp.float32),
        cost_estimate=pl.CostEstimate(
            flops=int(2 * B * n1 * (2 * D * H + n1 * H)),
            transcendentals=int(B * n1 * n1),
            bytes_accessed=int(4 * (2 * input_scale.size + 2 * bias.size))),
    )(input_scale, bias, params["Wq"], params["Wk"])
    return full[:, 1:, :]                           # drop the pad-token query row


# ---------------------------------------------------------------------------
# Plain-JAX glue (data-dependent sorts / argmax / gathers have no clean Pallas
# equivalent; the tiny (B, 9, 9) matmuls are left to fused XLA einsums).
# ---------------------------------------------------------------------------

def eliminate_rows(prob_sc, ind, phis):
    B, length, width = prob_sc.shape
    mask = (prob_sc[:, :, 0] > 0.85).astype(jnp.float32)              # (B, n)
    rang = jnp.broadcast_to(jnp.arange(length, dtype=jnp.float32)[None, :], (B, length))
    keys = rang * (1.0 - mask) + float(length) * mask
    ind_sc = jnp.argsort(keys, axis=1).astype(jnp.int32)
    m = jnp.broadcast_to(mask[:, :, None], prob_sc.shape)
    mm = jnp.concatenate(
        [mask[:, :, None], jnp.zeros((B, length, width - 1), jnp.float32)], axis=2)
    gidx = jnp.broadcast_to(ind_sc[:, :, None], prob_sc.shape)
    prob_sc = jnp.take_along_axis(prob_sc * (1.0 - m) + mm, gidx, axis=1)
    ind = jnp.take_along_axis(ind, ind_sc, axis=1)
    active = jnp.take_along_axis(1.0 - mask, ind_sc, axis=1)
    ind1 = jnp.broadcast_to(ind[:, :, None], phis.shape)
    ind2 = jnp.broadcast_to(ind[:, None, :], phis.shape)
    phis_out = jnp.take_along_axis(phis, ind1, axis=1) * active[:, :, None]
    phis_out = jnp.take_along_axis(phis_out, ind2, axis=2) * active[:, None, :]
    return prob_sc, ind, phis_out, active


def combine_matrices(prob_matrix, prob_matrix_scale, perm):
    B, _, length = prob_matrix_scale.shape
    first = jnp.zeros((B, 1, length), jnp.float32).at[:, 0, 0].set(1.0)
    pms = jnp.concatenate([first, prob_matrix_scale], axis=1)         # (B, L, L)
    new_perm = jnp.argmax(pms, axis=2).astype(jnp.int32)
    perm = jnp.take_along_axis(perm, new_perm, axis=1)
    prob_matrix = jnp.einsum('bij,bjk->bik', pms, prob_matrix)        # tiny bmm -> XLA
    return prob_matrix, pms, perm


def outputs_fn(inp, prob_matrix, perm):
    hard = jnp.take_along_axis(inp, jnp.broadcast_to(perm[:, :, None], inp.shape), axis=1)
    soft = jnp.einsum('bij,bjd->bid', prob_matrix, inp)               # tiny bmm -> XLA
    return hard, soft


def compute_loss_standin(prob_matrix, target, lp):
    # TODO(synk): Merge.compute_loss lives in an external module; stand-in NLL on
    #             the combined permutation matrix + REINFORCE-style weighting.
    p = jnp.take_along_axis(prob_matrix, target[:, :, None], axis=2)[:, :, 0]
    nll = -jnp.mean(jnp.log(p + 1e-6))
    lp_mean = jnp.mean(jnp.stack([l[:, 0] for l in lp], axis=0))
    pg_loss = jax.lax.stop_gradient(nll) * lp_mean
    return nll, pg_loss


# ---------------------------------------------------------------------------
# DCN forward (fwd_split + fwd_merge)
# ---------------------------------------------------------------------------

def fwd_merge(params, Inputs_N, target, Phis, Bs, lp, depth):
    Phis, Bs, Inputs_N = Phis[::-1], Bs[::-1], Inputs_N[::-1]
    B, n, D = Inputs_N[0].shape
    length = n
    perm = jnp.broadcast_to(jnp.arange(length + 1, dtype=jnp.int32)[None, :], (B, length + 1))
    ind = perm[:, :-1]
    prob_matrix = jnp.broadcast_to(
        jnp.eye(length + 1, dtype=jnp.float32)[None], (B, length + 1, length + 1))
    pad = jnp.broadcast_to(params["pad_token"][:-1][None, None, :], (B, 1, D))
    inp = jnp.concatenate([pad, Inputs_N[0]], axis=1)
    phis = Phis[0]
    input_scale = inp
    Perms = [perm]
    loss = pg_loss = None
    for scale in range(depth):
        if scale < depth - 1:
            prob_sc = merge_forward(params, input_scale, phis)
            input_norm = jnp.concatenate([pad, Inputs_N[scale + 1]], axis=1)
            phis = Phis[scale + 1]
            prob_sc, ind, phis, _ = eliminate_rows(prob_sc, ind, phis)
            prob_matrix, _, perm = combine_matrices(prob_matrix, prob_sc, perm)
            hard_out, soft_out = outputs_fn(input_norm, prob_matrix, perm)
            input_scale = hard_out
        else:
            prob_sc = merge_forward(params, input_scale, phis)
            prob_matrix, prob_sc, perm = combine_matrices(prob_matrix, prob_sc, perm)
            hard_out, soft_out = outputs_fn(inp, prob_matrix, perm)
            loss, pg_loss = compute_loss_standin(prob_matrix, target, lp)
        Perms.append(perm)
    return loss, pg_loss, Perms


def dcn_forward(params, x, tar, length, depth, key):
    var, Phis, Bs, Inputs_N, e, lp = fwd_split(params, x, depth, key)
    target = tar.astype(jnp.int32)
    loss, pg_loss, Perms = fwd_merge(params, Inputs_N, target, Phis, Bs, lp, depth)
    return Phis, Inputs_N, target, Perms, e, loss, pg_loss, var


# ---------------------------------------------------------------------------
# Deterministic parameter init + driver
# ---------------------------------------------------------------------------

def init_params(key, D, H):
    k1, k2, k3, k4 = jax.random.split(key, 4)
    return {
        "W_phi": 0.5 * jax.random.normal(k1, (D, D), jnp.float32),
        "w_s": 0.5 * jax.random.normal(k2, (D, 1), jnp.float32),
        "Wq": 0.5 * jax.random.normal(k3, (D, H), jnp.float32),
        "Wk": 0.5 * jax.random.normal(k4, (D, H), jnp.float32),
        "pad_token": -1.0 * jnp.ones((D + 1,), jnp.float32),
    }


if __name__ == "__main__":
    B, n, D, H, depth = 2, 8, 2, 16, 2
    key = jax.random.PRNGKey(0)
    kx, kp, ksamp = jax.random.split(key, 3)

    x = jax.random.uniform(kx, (B, n, D), dtype=jnp.float32)
    # mark the last point of each example as padding (x[..., 0] < 0 => mask = 0)
    x = x.at[:, n - 1, 0].set(-1.0)
    tar = jnp.broadcast_to(jnp.arange(n + 1, dtype=jnp.int32)[None, :], (B, n + 1))

    params = init_params(kp, D, H)
    fwd = jax.jit(dcn_forward, static_argnums=(3, 4))   # length, depth are static
    out = fwd(params, x, tar, n, depth, ksamp)
    jax.block_until_ready(out)
    print("KERNEL_OK")
</pallas_src>

<mosaic_0001>
module attributes {stable_mosaic.version = 11 : i64} {
  func.func @_split_fused_kernel(%arg0: memref<2x8x2xf32, #tpu.memory_space<vmem>>, %arg1: memref<2x8xf32, #tpu.memory_space<vmem>>, %arg2: memref<2x8x1xf32, #tpu.memory_space<vmem>>, %arg3: memref<2x1x8xf32, #tpu.memory_space<vmem>>, %arg4: memref<2x2x8xf32, #tpu.memory_space<vmem>>, %arg5: memref<2x2xf32, #tpu.memory_space<vmem>>, %arg6: memref<1x1x2xf32, #tpu.memory_space<vmem>>, %arg7: memref<2x8x8xf32, #tpu.memory_space<vmem>>, %arg8: memref<2x8x2xf32, #tpu.memory_space<vmem>>, %arg9: memref<2x2x8xf32, #tpu.memory_space<vmem>>, %arg10: memref<2x8xf32, #tpu.memory_space<vmem>>, %arg11: memref<1x1xf32, #tpu.memory_space<vmem>>, %arg12: memref<2x2x1xf32, #tpu.memory_space<vmem>>) attributes {dimension_semantics = [], scalar_prefetch = 0 : i64, scratch_operands = 0 : i64, tpu.core_type = #tpu.core_type<tc>} {
    %c0 = arith.constant 0 : index
    %c0_0 = arith.constant 0 : index
    %c0_1 = arith.constant 0 : index
    %0 = vector.load %arg0[%c0, %c0_0, %c0_1] : memref<2x8x2xf32, #tpu.memory_space<vmem>>, vector<2x8x2xf32>
    %c0_2 = arith.constant 0 : index
    %c0_3 = arith.constant 0 : index
    %1 = vector.load %arg1[%c0_2, %c0_3] : memref<2x8xf32, #tpu.memory_space<vmem>>, vector<2x8xf32>
    %c0_4 = arith.constant 0 : index
    %c0_5 = arith.constant 0 : index
    %c0_6 = arith.constant 0 : index
    %2 = vector.load %arg2[%c0_4, %c0_5, %c0_6] : memref<2x8x1xf32, #tpu.memory_space<vmem>>, vector<2x8x1xf32>
    %c0_7 = arith.constant 0 : index
    %c0_8 = arith.constant 0 : index
    %c0_9 = arith.constant 0 : index
    %3 = vector.load %arg3[%c0_7, %c0_8, %c0_9] : memref<2x1x8xf32, #tpu.memory_space<vmem>>, vector<2x1x8xf32>
    %cst = arith.constant dense<0.000000e+00> : vector<2xf32>
    %4 = vector.multi_reduction <add>, %1, %cst [1] : vector<2x8xf32> to vector<2xf32>
    %5 = vector.shape_cast %4 : vector<2xf32> to vector<2x1xf32>
    %cst_10 = arith.constant 1.000000e+00 : f32
    %6 = vector.broadcast %cst_10 : f32 to vector<2x1xf32>
    %7 = arith.maximumf %5, %6 : vector<2x1xf32>
    %c0_11 = arith.constant 0 : index
    %c0_12 = arith.constant 0 : index
    %8 = vector.load %arg5[%c0_11, %c0_12] : memref<2x2xf32, #tpu.memory_space<vmem>>, vector<2x2xf32>
    %9 = vector.shape_cast %8 : vector<2x2xf32> to vector<1x2x2xf32>
    %10 = vector.shape_cast %9 : vector<1x2x2xf32> to vector<1x2x2xf32>
    %11 = vector.broadcast %10 : vector<1x2x2xf32> to vector<2x2x2xf32>
    "tpu.trace_start"() <{level = 10 : i32, message = "bnd,bde->bne"}> : () -> ()
    %cst_13 = arith.constant dense<0.000000e+00> : vector<2x8x2xf32>
    %12 = tpu.matmul %0, %11, %cst_13 {dimension_numbers = #tpu.dot_dimension_numbers<[2], [1], [1], [2], [0, 0, 0, 1, 1, 2], [0], [0]>} : vector<2x8x2xf32>, vector<2x2x2xf32>, vector<2x8x2xf32> -> vector<2x8x2xf32>
    "tpu.trace_stop"() : () -> ()
    "tpu.trace_start"() <{level = 10 : i32, message = "bnd,bmd->bnm"}> : () -> ()
    %cst_14 = arith.constant dense<0.000000e+00> : vector<2x8x8xf32>
    %13 = tpu.matmul %12, %0, %cst_14 {dimension_numbers = #tpu.dot_dimension_numbers<[2], [2], [1], [1], [0, 0, 0, 1, 1, 1], [0], [0]>} : vector<2x8x2xf32>, vector<2x8x2xf32>, vector<2x8x8xf32> -> vector<2x8x8xf32>
    "tpu.trace_stop"() : () -> ()
    %cst_15 = arith.constant 1.000000e+00 : f32
    %14 = vector.broadcast %cst_15 : f32 to vector<2x1x8xf32>
    %15 = arith.subf %3, %14 : vector<2x1x8xf32>
    %cst_16 = arith.constant 1.000000e+09 : f32
    %16 = vector.broadcast %cst_16 : f32 to vector<2x1x8xf32>
    %17 = arith.mulf %15, %16 : vector<2x1x8xf32>
    %18 = vector.broadcast %17 : vector<2x1x8xf32> to vector<2x8x8xf32>
    %19 = arith.addf %13, %18 : vector<2x8x8xf32>
    %cst_17 = arith.constant dense<0xFF800000> : vector<2x8xf32>
    %20 = vector.multi_reduction <maximumf>, %19, %cst_17 [2] : vector<2x8x8xf32> to vector<2x8xf32>
    %21 = vector.shape_cast %20 : vector<2x8xf32> to vector<2x8x1xf32>
    %22 = vector.broadcast %21 : vector<2x8x1xf32> to vector<2x8x8xf32>
    %23 = arith.subf %19, %22 : vector<2x8x8xf32>
    %24 = math.exp %23 : vector<2x8x8xf32>
    %cst_18 = arith.constant dense<0.000000e+00> : vector<2x8xf32>
    %25 = vector.multi_reduction <add>, %24, %cst_18 [2] : vector<2x8x8xf32> to vector<2x8xf32>
    %26 = vector.shape_cast %25 : vector<2x8xf32> to vector<2x8x1xf32>
    %27 = vector.broadcast %26 : vector<2x8x1xf32> to vector<2x8x8xf32>
    %28 = arith.divf %24, %27 : vector<2x8x8xf32>
    %29 = vector.broadcast %2 : vector<2x8x1xf32> to vector<2x8x8xf32>
    %30 = arith.mulf %28, %29 : vector<2x8x8xf32>
    "tpu.trace_start"() <{level = 10 : i32, message = "bnm,bmd->bnd"}> : () -> ()
    %cst_19 = arith.constant dense<0.000000e+00> : vector<2x8x2xf32>
    %31 = tpu.matmul %30, %0, %cst_19 {dimension_numbers = #tpu.dot_dimension_numbers<[2], [1], [1], [2], [0, 0, 0, 1, 1, 2], [0], [0]>} : vector<2x8x8xf32>, vector<2x8x2xf32>, vector<2x8x2xf32> -> vector<2x8x2xf32>
    "tpu.trace_stop"() : () -> ()
    %c0_20 = arith.constant 0 : index
    %c0_21 = arith.constant 0 : index
    %c0_22 = arith.constant 0 : index
    %32 = vector.load %arg6[%c0_20, %c0_21, %c0_22] : memref<1x1x2xf32, #tpu.memory_space<vmem>>, vector<1x1x2xf32>
    %33 = vector.broadcast %32 : vector<1x1x2xf32> to vector<2x8x2xf32>
    %34 = arith.mulf %31, %33 : vector<2x8x2xf32>
    %cst_23 = arith.constant dense<0.000000e+00> : vector<2x8xf32>
    %35 = vector.multi_reduction <add>, %34, %cst_23 [2] : vector<2x8x2xf32> to vector<2x8xf32>
    %c0_24 = arith.constant 0 : index
    %c0_25 = arith.constant 0 : index
    %c0_26 = arith.constant 0 : index
    %36 = vector.load %arg7[%c0_24, %c0_25, %c0_26] : memref<2x8x8xf32, #tpu.memory_space<vmem>>, vector<2x8x8xf32>
    tpu.vector_store %arg7[%c0_24, %c0_25, %c0_26], %30 {strides = array<i32>} : memref<2x8x8xf32, #tpu.memory_space<vmem>>, vector<2x8x8xf32>,
    %c0_27 = arith.constant 0 : index
    %c0_28 = arith.constant 0 : index
    %c0_29 = arith.constant 0 : index
    %37 = vector.load %arg8[%c0_27, %c0_28, %c0_29] : memref<2x8x2xf32, #tpu.memory_space<vmem>>, vector<2x8x2xf32>
    tpu.vector_store %arg8[%c0_27, %c0_28, %c0_29], %31 {strides = array<i32>} : memref<2x8x2xf32, #tpu.memory_space<vmem>>, vector<2x8x2xf32>,
    %cst_30 = arith.constant 0.000000e+00 : f32
    %38 = vector.broadcast %cst_30 : f32 to vector<2x8xf32>
    %cst_31 = arith.constant 0.000000e+00 : f32
    %39 = vector.broadcast %cst_31 : f32 to vector<1x1xf32>
    %cst_32 = arith.constant 1.000000e-01 : f32
    %40 = vector.broadcast %cst_32 : f32 to vector<2x8xf32>
    %41 = arith.mulf %40, %38 : vector<2x8xf32>
    %42 = arith.addf %35, %41 : vector<2x8xf32>
    %cst_33 = arith.constant 0.000000e+00 : f32
    %43 = vector.broadcast %cst_33 : f32 to vector<2x8xf32>
    %44 = arith.addf %42, %43 : vector<2x8xf32>
    %45 = arith.negf %44 : vector<2x8xf32>
    %46 = math.exp %45 : vector<2x8xf32>
    %cst_34 = arith.constant 1.000000e+00 : f32
    %47 = vector.broadcast %cst_34 : f32 to vector<2x8xf32>
    %48 = arith.addf %47, %46 : vector<2x8xf32>
    %49 = arith.divf %47, %48 : vector<2x8xf32>
    %50 = arith.mulf %49, %1 : vector<2x8xf32>
    %c0_35 = arith.constant 0 : index
    %c0_36 = arith.constant 0 : index
    %c0_37 = arith.constant 0 : index
    %51 = vector.load %arg4[%c0_35, %c0_36, %c0_37] : memref<2x2x8xf32, #tpu.memory_space<vmem>>, vector<1x2x8xf32>
    %52 = vector.shape_cast %51 : vector<1x2x8xf32> to vector<2x8xf32>
    %53 = arith.cmpf ogt, %50, %52 : vector<2x8xf32>
    %54 = arith.extui %53 : vector<2x8xi1> to vector<2x8xi32>
    %55 = arith.sitofp %54 : vector<2x8xi32> to vector<2x8xf32>
    %cst_38 = arith.constant 2.000000e+00 : f32
    %56 = vector.broadcast %cst_38 : f32 to vector<2x8xf32>
    %57 = arith.mulf %56, %38 : vector<2x8xf32>
    %58 = arith.addf %57, %55 : vector<2x8xf32>
    %cst_39 = arith.constant dense<0.000000e+00> : vector<2xf32>
    %59 = vector.multi_reduction <add>, %50, %cst_39 [1] : vector<2x8xf32> to vector<2xf32>
    %60 = vector.shape_cast %59 : vector<2xf32> to vector<2x1xf32>
    %61 = arith.divf %60, %7 : vector<2x1xf32>
    %62 = vector.broadcast %61 : vector<2x1xf32> to vector<2x8xf32>
    %63 = arith.subf %50, %62 : vector<2x8xf32>
    %64 = arith.mulf %63, %1 : vector<2x8xf32>
    %65 = arith.mulf %64, %64 : vector<2x8xf32>
    %cst_40 = arith.constant dense<0.000000e+00> : vector<2xf32>
    %66 = vector.multi_reduction <add>, %65, %cst_40 [1] : vector<2x8xf32> to vector<2xf32>
    %67 = vector.shape_cast %66 : vector<2xf32> to vector<2x1xf32>
    %68 = arith.divf %67, %7 : vector<2x1xf32>
    %cst_41 = arith.constant dense<0.000000e+00> : vector<1xf32>
    %69 = vector.multi_reduction <add>, %68, %cst_41 [0] : vector<2x1xf32> to vector<1xf32>
    %70 = vector.shape_cast %69 : vector<1xf32> to vector<1x1xf32>
    %cst_42 = arith.constant 2.000000e+00 : f32
    %71 = vector.broadcast %cst_42 : f32 to vector<1x1xf32>
    %72 = arith.divf %70, %71 : vector<1x1xf32>
    %73 = arith.addf %39, %72 : vector<1x1xf32>
    %74 = arith.mulf %50, %55 : vector<2x8xf32>
    %cst_43 = arith.constant 1.000000e+00 : f32
    %75 = vector.broadcast %cst_43 : f32 to vector<2x8xf32>
    %76 = arith.subf %75, %50 : vector<2x8xf32>
    %cst_44 = arith.constant 1.000000e+00 : f32
    %77 = vector.broadcast %cst_44 : f32 to vector<2x8xf32>
    %78 = arith.subf %77, %55 : vector<2x8xf32>
    %79 = arith.mulf %76, %78 : vector<2x8xf32>
    %80 = arith.addf %74, %79 : vector<2x8xf32>
    %cst_45 = arith.constant 0.000000e+00 : f32
    %81 = vector.broadcast %cst_45 : f32 to vector<2x8xf32>
    %82 = arith.cmpf ogt, %1, %81 : vector<2x8xf32>
    %cst_46 = arith.constant 9.99999997E-7 : f32
    %83 = vector.broadcast %cst_46 : f32 to vector<2x8xf32>
    %84 = arith.addf %80, %83 : vector<2x8xf32>
    %85 = math.log %84 : vector<2x8xf32>
    %cst_47 = arith.constant 0.000000e+00 : f32
    %86 = vector.broadcast %cst_47 : f32 to vector<2x8xf32>
    %87 = arith.select %82, %85, %86 : vector<2x8xi1>, vector<2x8xf32>
    %cst_48 = arith.constant dense<0.000000e+00> : vector<2xf32>
    %88 = vector.multi_reduction <add>, %87, %cst_48 [1] : vector<2x8xf32> to vector<2xf32>
    %89 = vector.shape_cast %88 : vector<2xf32> to vector<2x1xf32>
    %90 = arith.divf %89, %7 : vector<2x1xf32>
    %c0_49 = arith.constant 0 : index
    %c0_50 = arith.constant 0 : index
    %c0_51 = arith.constant 0 : index
    %91 = vector.load %arg9[%c0_49, %c0_50, %c0_51] : memref<2x2x8xf32, #tpu.memory_space<vmem>>, vector<1x2x8xf32>
    %92 = vector.shape_cast %91 : vector<1x2x8xf32> to vector<2x8xf32>
    %93 = vector.shape_cast %50 : vector<2x8xf32> to vector<1x2x8xf32>
    tpu.vector_store %arg9[%c0_49, %c0_50, %c0_51], %93 {strides = array<i32>} : memref<2x2x8xf32, #tpu.memory_space<vmem>>, vector<1x2x8xf32>,
    %c0_52 = arith.constant 0 : index
    %c0_53 = arith.constant 0 : index
    %c0_54 = arith.constant 0 : index
    %94 = vector.load %arg12[%c0_52, %c0_53, %c0_54] : memref<2x2x1xf32, #tpu.memory_space<vmem>>, vector<1x2x1xf32>
    %95 = vector.shape_cast %94 : vector<1x2x1xf32> to vector<2x1xf32>
    %96 = vector.shape_cast %90 : vector<2x1xf32> to vector<1x2x1xf32>
    tpu.vector_store %arg12[%c0_52, %c0_53, %c0_54], %96 {strides = array<i32>} : memref<2x2x1xf32, #tpu.memory_space<vmem>>, vector<1x2x1xf32>,
    %cst_55 = arith.constant 1.000000e-01 : f32
    %97 = vector.broadcast %cst_55 : f32 to vector<2x8xf32>
    %98 = arith.mulf %97, %58 : vector<2x8xf32>
    %99 = arith.addf %35, %98 : vector<2x8xf32>
    %cst_56 = arith.constant 1.000000e-01 : f32
    %100 = vector.broadcast %cst_56 : f32 to vector<2x8xf32>
    %101 = arith.addf %99, %100 : vector<2x8xf32>
    %102 = arith.negf %101 : vector<2x8xf32>
    %103 = math.exp %102 : vector<2x8xf32>
    %cst_57 = arith.constant 1.000000e+00 : f32
    %104 = vector.broadcast %cst_57 : f32 to vector<2x8xf32>
    %105 = arith.addf %104, %103 : vector<2x8xf32>
    %106 = arith.divf %104, %105 : vector<2x8xf32>
    %107 = arith.mulf %106, %1 : vector<2x8xf32>
    %c1 = arith.constant 1 : index
    %c0_58 = arith.constant 0 : index
    %c0_59 = arith.constant 0 : index
    %108 = vector.load %arg4[%c1, %c0_58, %c0_59] : memref<2x2x8xf32, #tpu.memory_space<vmem>>, vector<1x2x8xf32>
    %109 = vector.shape_cast %108 : vector<1x2x8xf32> to vector<2x8xf32>
    %110 = arith.cmpf ogt, %107, %109 : vector<2x8xf32>
    %111 = arith.extui %110 : vector<2x8xi1> to vector<2x8xi32>
    %112 = arith.sitofp %111 : vector<2x8xi32> to vector<2x8xf32>
    %cst_60 = arith.constant 2.000000e+00 : f32
    %113 = vector.broadcast %cst_60 : f32 to vector<2x8xf32>
    %114 = arith.mulf %113, %58 : vector<2x8xf32>
    %115 = arith.addf %114, %112 : vector<2x8xf32>
    %cst_61 = arith.constant dense<0.000000e+00> : vector<2xf32>
    %116 = vector.multi_reduction <add>, %107, %cst_61 [1] : vector<2x8xf32> to vector<2xf32>
    %117 = vector.shape_cast %116 : vector<2xf32> to vector<2x1xf32>
    %118 = arith.divf %117, %7 : vector<2x1xf32>
    %119 = vector.broadcast %118 : vector<2x1xf32> to vector<2x8xf32>
    %120 = arith.subf %107, %119 : vector<2x8xf32>
    %121 = arith.mulf %120, %1 : vector<2x8xf32>
    %122 = arith.mulf %121, %121 : vector<2x8xf32>
    %cst_62 = arith.constant dense<0.000000e+00> : vector<2xf32>
    %123 = vector.multi_reduction <add>, %122, %cst_62 [1] : vector<2x8xf32> to vector<2xf32>
    %124 = vector.shape_cast %123 : vector<2xf32> to vector<2x1xf32>
    %125 = arith.divf %124, %7 : vector<2x1xf32>
    %cst_63 = arith.constant dense<0.000000e+00> : vector<1xf32>
    %126 = vector.multi_reduction <add>, %125, %cst_63 [0] : vector<2x1xf32> to vector<1xf32>
    %127 = vector.shape_cast %126 : vector<1xf32> to vector<1x1xf32>
    %cst_64 = arith.constant 2.000000e+00 : f32
    %128 = vector.broadcast %cst_64 : f32 to vector<1x1xf32>
    %129 = arith.divf %127, %128 : vector<1x1xf32>
    %130 = arith.addf %73, %129 : vector<1x1xf32>
    %131 = arith.mulf %107, %112 : vector<2x8xf32>
    %cst_65 = arith.constant 1.000000e+00 : f32
    %132 = vector.broadcast %cst_65 : f32 to vector<2x8xf32>
    %133 = arith.subf %132, %107 : vector<2x8xf32>
    %cst_66 = arith.constant 1.000000e+00 : f32
    %134 = vector.broadcast %cst_66 : f32 to vector<2x8xf32>
    %135 = arith.subf %134, %112 : vector<2x8xf32>
    %136 = arith.mulf %133, %135 : vector<2x8xf32>
    %137 = arith.addf %131, %136 : vector<2x8xf32>
    %cst_67 = arith.constant 0.000000e+00 : f32
    %138 = vector.broadcast %cst_67 : f32 to vector<2x8xf32>
    %139 = arith.cmpf ogt, %1, %138 : vector<2x8xf32>
    %cst_68 = arith.constant 9.99999997E-7 : f32
    %140 = vector.broadcast %cst_68 : f32 to vector<2x8xf32>
    %141 = arith.addf %137, %140 : vector<2x8xf32>
    %142 = math.log %141 : vector<2x8xf32>
    %cst_69 = arith.constant 0.000000e+00 : f32
    %143 = vector.broadcast %cst_69 : f32 to vector<2x8xf32>
    %144 = arith.select %139, %142, %143 : vector<2x8xi1>, vector<2x8xf32>
    %cst_70 = arith.constant dense<0.000000e+00> : vector<2xf32>
    %145 = vector.multi_reduction <add>, %144, %cst_70 [1] : vector<2x8xf32> to vector<2xf32>
    %146 = vector.shape_cast %145 : vector<2xf32> to vector<2x1xf32>
    %147 = arith.divf %146, %7 : vector<2x1xf32>
    %c1_71 = arith.constant 1 : index
    %c0_72 = arith.constant 0 : index
    %c0_73 = arith.constant 0 : index
    %148 = vector.load %arg9[%c1_71, %c0_72, %c0_73] : memref<2x2x8xf32, #tpu.memory_space<vmem>>, vector<1x2x8xf32>
    %149 = vector.shape_cast %148 : vector<1x2x8xf32> to vector<2x8xf32>
    %150 = vector.shape_cast %107 : vector<2x8xf32> to vector<1x2x8xf32>
    tpu.vector_store %arg9[%c1_71, %c0_72, %c0_73], %150 {strides = array<i32>} : memref<2x2x8xf32, #tpu.memory_space<vmem>>, vector<1x2x8xf32>,
    %c1_74 = arith.constant 1 : index
    %c0_75 = arith.constant 0 : index
    %c0_76 = arith.constant 0 : index
    %151 = vector.load %arg12[%c1_74, %c0_75, %c0_76] : memref<2x2x1xf32, #tpu.memory_space<vmem>>, vector<1x2x1xf32>
    %152 = vector.shape_cast %151 : vector<1x2x1xf32> to vector<2x1xf32>
    %153 = vector.shape_cast %147 : vector<2x1xf32> to vector<1x2x1xf32>
    tpu.vector_store %arg12[%c1_74, %c0_75, %c0_76], %153 {strides = array<i32>} : memref<2x2x1xf32, #tpu.memory_space<vmem>>, vector<1x2x1xf32>,
    %154 = arith.mulf %115, %1 : vector<2x8xf32>
    %cst_77 = arith.constant 1.000000e+00 : f32
    %155 = vector.broadcast %cst_77 : f32 to vector<2x8xf32>
    %156 = arith.subf %155, %1 : vector<2x8xf32>
    %cst_78 = arith.constant 1.000000e+06 : f32
    %157 = vector.broadcast %cst_78 : f32 to vector<2x8xf32>
    %158 = arith.mulf %156, %157 : vector<2x8xf32>
    %159 = arith.addf %154, %158 : vector<2x8xf32>
    %c0_79 = arith.constant 0 : index
    %c0_80 = arith.constant 0 : index
    %160 = vector.load %arg10[%c0_79, %c0_80] : memref<2x8xf32, #tpu.memory_space<vmem>>, vector<2x8xf32>
    tpu.vector_store %arg10[%c0_79, %c0_80], %159 {strides = array<i32>} : memref<2x8xf32, #tpu.memory_space<vmem>>, vector<2x8xf32>,
    %c0_81 = arith.constant 0 : index
    %c0_82 = arith.constant 0 : index
    %161 = vector.load %arg11[%c0_81, %c0_82] : memref<1x1xf32, #tpu.memory_space<vmem>>, vector<1x1xf32>
    tpu.vector_store %arg11[%c0_81, %c0_82], %130 {strides = array<i32>} : memref<1x1xf32, #tpu.memory_space<vmem>>, vector<1x1xf32>,
    return
  }
}

module attributes {stable_mosaic.version = 11 : i64} {
  func.func @_merge_kernel(%arg0: memref<2x9x2xf32, #tpu.memory_space<vmem>>, %arg1: memref<2x9x9xf32, #tpu.memory_space<vmem>>, %arg2: memref<2x16xf32, #tpu.memory_space<vmem>>, %arg3: memref<2x16xf32, #tpu.memory_space<vmem>>, %arg4: memref<2x9x9xf32, #tpu.memory_space<vmem>>) attributes {dimension_semantics = [], scalar_prefetch = 0 : i64, scratch_operands = 0 : i64, tpu.core_type = #tpu.core_type<tc>} {
    %c0 = arith.constant 0 : index
    %c0_0 = arith.constant 0 : index
    %c0_1 = arith.constant 0 : index
    %0 = vector.load %arg0[%c0, %c0_0, %c0_1] : memref<2x9x2xf32, #tpu.memory_space<vmem>>, vector<2x9x2xf32>
    %c0_2 = arith.constant 0 : index
    %c0_3 = arith.constant 0 : index
    %1 = vector.load %arg2[%c0_2, %c0_3] : memref<2x16xf32, #tpu.memory_space<vmem>>, vector<2x16xf32>
    %2 = vector.shape_cast %1 : vector<2x16xf32> to vector<1x2x16xf32>
    %3 = vector.shape_cast %2 : vector<1x2x16xf32> to vector<1x2x16xf32>
    %4 = vector.broadcast %3 : vector<1x2x16xf32> to vector<2x2x16xf32>
    %c0_4 = arith.constant 0 : index
    %c0_5 = arith.constant 0 : index
    %5 = vector.load %arg3[%c0_4, %c0_5] : memref<2x16xf32, #tpu.memory_space<vmem>>, vector<2x16xf32>
    %6 = vector.shape_cast %5 : vector<2x16xf32> to vector<1x2x16xf32>
    %7 = vector.shape_cast %6 : vector<1x2x16xf32> to vector<1x2x16xf32>
    %8 = vector.broadcast %7 : vector<1x2x16xf32> to vector<2x2x16xf32>
    "tpu.trace_start"() <{level = 10 : i32, message = "bnd,bdh->bnh"}> : () -> ()
    %cst = arith.constant dense<0.000000e+00> : vector<2x9x16xf32>
    %9 = tpu.matmul %0, %4, %cst {dimension_numbers = #tpu.dot_dimension_numbers<[2], [1], [1], [2], [0, 0, 0, 1, 1, 2], [0], [0]>} : vector<2x9x2xf32>, vector<2x2x16xf32>, vector<2x9x16xf32> -> vector<2x9x16xf32>
    %cst_6 = arith.constant dense<0.000000e+00> : vector<2x9x16xf32>
    %10 = tpu.matmul %0, %8, %cst_6 {dimension_numbers = #tpu.dot_dimension_numbers<[2], [1], [1], [2], [0, 0, 0, 1, 1, 2], [0], [0]>} : vector<2x9x2xf32>, vector<2x2x16xf32>, vector<2x9x16xf32> -> vector<2x9x16xf32>
    "tpu.trace_stop"() : () -> ()
    "tpu.trace_start"() <{level = 10 : i32, message = "bqh,bkh->bqk"}> : () -> ()
    %cst_7 = arith.constant dense<0.000000e+00> : vector<2x9x9xf32>
    %11 = tpu.matmul %9, %10, %cst_7 {dimension_numbers = #tpu.dot_dimension_numbers<[2], [2], [1], [1], [0, 0, 0, 1, 1, 1], [0], [0]>} : vector<2x9x16xf32>, vector<2x9x16xf32>, vector<2x9x9xf32> -> vector<2x9x9xf32>
    "tpu.trace_stop"() : () -> ()
    %c0_8 = arith.constant 0 : index
    %c0_9 = arith.constant 0 : index
    %c0_10 = arith.constant 0 : index
    %12 = vector.load %arg1[%c0_8, %c0_9, %c0_10] : memref<2x9x9xf32, #tpu.memory_space<vmem>>, vector<2x9x9xf32>
    %13 = arith.addf %11, %12 : vector<2x9x9xf32>
    %cst_11 = arith.constant dense<0xFF800000> : vector<2x9xf32>
    %14 = vector.multi_reduction <maximumf>, %13, %cst_11 [2] : vector<2x9x9xf32> to vector<2x9xf32>
    %15 = vector.shape_cast %14 : vector<2x9xf32> to vector<2x9x1xf32>
    %16 = vector.broadcast %15 : vector<2x9x1xf32> to vector<2x9x9xf32>
    %17 = arith.subf %13, %16 : vector<2x9x9xf32>
    %18 = math.exp %17 : vector<2x9x9xf32>
    %cst_12 = arith.constant dense<0.000000e+00> : vector<2x9xf32>
    %19 = vector.multi_reduction <add>, %18, %cst_12 [2] : vector<2x9x9xf32> to vector<2x9xf32>
    %20 = vector.shape_cast %19 : vector<2x9xf32> to vector<2x9x1xf32>
    %21 = vector.broadcast %20 : vector<2x9x1xf32> to vector<2x9x9xf32>
    %22 = arith.divf %18, %21 : vector<2x9x9xf32>
    %c0_13 = arith.constant 0 : index
    %c0_14 = arith.constant 0 : index
    %c0_15 = arith.constant 0 : index
    %23 = vector.load %arg4[%c0_13, %c0_14, %c0_15] : memref<2x9x9xf32, #tpu.memory_space<vmem>>, vector<2x9x9xf32>
    tpu.vector_store %arg4[%c0_13, %c0_14, %c0_15], %22 {strides = array<i32>} : memref<2x9x9xf32, #tpu.memory_space<vmem>>, vector<2x9x9xf32>,
    return
  }
}

</mosaic_0001>

<llo_original>
// kernel: dcn_forward.4
$region0: #{dcn_forward.4}
  #allocation0 [shape = 'u32[]', space=smem, size = 0x4, offset = 0x4, fixed_abs, tag = 'smem constant byte address 0x4 - core index']
  #allocation1 [shape = 'u32[144,128]{1,0:T(1,128)}', space=vmem, size = 0x12000, scoped, tag = 'internal scratch']
  %s0 = inlined_call_operand.vmem [shape: f32[2,9,2], index: 0, kind: input, shape index: {}]
  %s1 = inlined_call_operand.vmem [shape: f32[2,9,9], index: 1, kind: input, shape index: {}]
  %s2 = inlined_call_operand.vmem [shape: f32[2,16], index: 2, kind: input, shape index: {}]
  %s3 = inlined_call_operand.vmem [shape: f32[2,16], index: 3, kind: input, shape index: {}]
  %s4 = inlined_call_operand.vmem [shape: f32[2,9,9], index: 4, kind: output, shape index: {}]
  %s5 = sld [smem:[#allocation0]]
  $region26: #{dcn_forward.4} parent=0
    _
  %s7 = ssub.s32 1, %s5
  %s8 = scalar_select 0, %s7, %s5
  // Predicated region
  $region2: #{dcn_forward.4} parent=0 // pred_check
    _
  $region3: #{dcn_forward.4} parent=0 // pred_check_branch
    %10 = sbr.rel (0) target = $region5
  $region4: #{dcn_forward.4} parent=0 // pred_region
    _
  $region5: #{dcn_forward.4} parent=0 // pred_fallthru
    _
  // Predicated region
  $region6: #{dcn_forward.4} parent=0 // pred_check
    _
  $region7: #{dcn_forward.4} parent=0 // pred_check_branch
    %12 = sbr.rel (0) target = $region9
  $region8: #{dcn_forward.4} parent=0 // pred_region
    _
  $region9: #{dcn_forward.4} parent=0 // pred_fallthru
    _
  // Predicated region
  $region10: #{dcn_forward.4} parent=0 // pred_check
    _
  $region11: #{dcn_forward.4} parent=0 // pred_check_branch
    %14 = sbr.rel (0) target = $region13
  $region12: #{dcn_forward.4} parent=0 // pred_region
    _
  $region13: #{dcn_forward.4} parent=0 // pred_fallthru
    _
  // Predicated region
  $region14: #{dcn_forward.4} parent=0 // pred_check
    _
  $region15: #{dcn_forward.4} parent=0 // pred_check_branch
    %16 = sbr.rel (0) target = $region17
  $region16: #{dcn_forward.4} parent=0 // pred_region
    _
  $region17: #{dcn_forward.4} parent=0 // pred_fallthru
    _
  %v17 = vld [vmem:[%s0] sm:$0xff]
  %v18 = vld [vmem:[%s0 + $0x8] sm:$0x1]
  %v19 = vld [vmem:[%s0 + $0x10] sm:$0xff]
  %v20 = vld [vmem:[%s0 + $0x18] sm:$0x1]
  %v21 = vld [vmem:[%s2] sm:$0x3]
  %v22 = vld [vmem:[%s3] sm:$0x3]
  %vm23 = vcmask 15360
  %v25 = vsel %vm23, %v17, 0
  %v28 = vsel %vm23, %v18, 0
  %vm30 = vcmask 1041408
  %v32 = vsel %vm30, %v21, 0
  %34 = vmatprep.subr.mxu0 0.0
  %35 = vmatpush1.msra.mxu0 0.0
  %36 = vmatprep.subr.mxu0 0.0
  %37 = vmatpush1.msra.mxu0 0.0
  %38 = vmatprep.subr.mxu0 0.0
  %39 = vmatpush1.msra.mxu0 0.0
  %40 = vmatprep.subr.mxu0 0.0
  %41 = vmatpush1.msra.mxu0 0.0
  %42 = vmatprep.subr.mxu0 0.0
  %43 = vmatpush1.msra.mxu0 0.0
  %44 = vmatprep.subr.mxu0 0.0
  %45 = vmatpush1.msra.mxu0 0.0
  %46 = vmatprep.subr.mxu0 0.0
  %47 = vmatpush1.msra.mxu0 0.0
  %48 = vmatprep.subr.mxu0 0.0
  %49 = vmatpush1.msra.mxu0 0.0
  %50 = vmatprep.subr.mxu0 0.0
  %51 = vmatpush1.msra.mxu0 0.0
  %52 = vmatprep.subr.mxu0 0.0
  %53 = vmatpush1.msra.mxu0 0.0
  %54 = vmatprep.subr.mxu0 0.0
  %55 = vmatpush1.msra.mxu0 0.0
  %56 = vmatprep.subr.mxu0 0.0
  %57 = vmatpush1.msra.mxu0 0.0
  %58 = vmatprep.subr.mxu0 0.0
  %59 = vmatpush1.msra.mxu0 0.0
  %60 = vmatprep.subr.mxu0 0.0
  %61 = vmatpush1.msra.mxu0 0.0
  %62 = vmatprep.subr.mxu0 0.0
  %63 = vmatpush1.msra.mxu0 0.0
  %64 = vmatprep.subr.mxu0 0.0
  %65 = vmatpush1.msra.mxu0 %v32
  %66 = vmatprep.subr.mxu0 0.0
  %67 = vmatpush2.msra.mxu0 0.0
  %68 = vmatprep.subr.mxu0 0.0
  %69 = vmatpush2.msra.mxu0 0.0
  %70 = vmatprep.subr.mxu0 0.0
  %71 = vmatpush2.msra.mxu0 0.0
  %72 = vmatprep.subr.mxu0 0.0
  %73 = vmatpush2.msra.mxu0 0.0
  %74 = vmatprep.subr.mxu0 0.0
  %75 = vmatpush2.msra.mxu0 0.0
  %76 = vmatprep.subr.mxu0 0.0
  %77 = vmatpush2.msra.mxu0 0.0
  %78 = vmatprep.subr.mxu0 0.0
  %79 = vmatpush2.msra.mxu0 0.0
  %80 = vmatprep.subr.mxu0 0.0
  %81 = vmatpush2.msra.mxu0 0.0
  %82 = vmatprep.subr.mxu0 0.0
  %83 = vmatpush2.msra.mxu0 0.0
  %84 = vmatprep.subr.mxu0 0.0
  %85 = vmatpush2.msra.mxu0 0.0
  %86 = vmatprep.subr.mxu0 0.0
  %87 = vmatpush2.msra.mxu0 0.0
  %88 = vmatprep.subr.mxu0 0.0
  %89 = vmatpush2.msra.mxu0 0.0
  %90 = vmatprep.subr.mxu0 0.0
  %91 = vmatpush2.msra.mxu0 0.0
  %92 = vmatprep.subr.mxu0 0.0
  %93 = vmatpush2.msra.mxu0 0.0
  %94 = vmatprep.subr.mxu0 0.0
  %95 = vmatpush2.msra.mxu0 0.0
  %96 = vmatprep.subr.mxu0 0.0
  %97 = vmatpush2.msra.mxu0 0.0
  %98 = vmatprep.mubr.f32.mxu0 0.0
  %99 = vmatmul.mubr.f32.gmra.mxu0 %v25
  %v100 = vpop.f32.mrf.mxu0
  %v101 = vadd.f32 0.0, %v100
  %v102 = vpop.f32.mrf.mxu0
  %103 = vmatprep.mubr.f32.mxu0 0.0
  %104 = vmatmul.mubr.f32.gmra.mxu0 %v28
  %v105 = vpop.f32.mrf.mxu0
  %v106 = vadd.f32 0.0, %v105
  %v107 = vpop.f32.mrf.mxu0
  %108 = vdwg.mxu0
  %v110 = vsel %vm23, %v19, 0
  %v113 = vsel %vm23, %v20, 0
  %115 = vmatprep.subr.mxu0 0.0
  %116 = vmatpush1.msra.mxu0 0.0
  %117 = vmatprep.subr.mxu0 0.0
  %118 = vmatpush1.msra.mxu0 0.0
  %119 = vmatprep.subr.mxu0 0.0
  %120 = vmatpush1.msra.mxu0 0.0
  %121 = vmatprep.subr.mxu0 0.0
  %122 = vmatpush1.msra.mxu0 0.0
  %123 = vmatprep.subr.mxu0 0.0
  %124 = vmatpush1.msra.mxu0 0.0
  %125 = vmatprep.subr.mxu0 0.0
  %126 = vmatpush1.msra.mxu0 0.0
  %127 = vmatprep.subr.mxu0 0.0
  %128 = vmatpush1.msra.mxu0 0.0
  %129 = vmatprep.subr.mxu0 0.0
  %130 = vmatpush1.msra.mxu0 0.0
  %131 = vmatprep.subr.mxu0 0.0
  %132 = vmatpush1.msra.mxu0 0.0
  %133 = vmatprep.subr.mxu0 0.0
  %134 = vmatpush1.msra.mxu0 0.0
  %135 = vmatprep.subr.mxu0 0.0
  %136 = vmatpush1.msra.mxu0 0.0
  %137 = vmatprep.subr.mxu0 0.0
  %138 = vmatpush1.msra.mxu0 0.0
  %139 = vmatprep.subr.mxu0 0.0
  %140 = vmatpush1.msra.mxu0 0.0
  %141 = vmatprep.subr.mxu0 0.0
  %142 = vmatpush1.msra.mxu0 0.0
  %143 = vmatprep.subr.mxu0 0.0
  %144 = vmatpush1.msra.mxu0 0.0
  %145 = vmatprep.subr.mxu0 0.0
  %146 = vmatpush1.msra.mxu0 %v32
  %147 = vmatprep.subr.mxu0 0.0
  %148 = vmatpush2.msra.mxu0 0.0
  %149 = vmatprep.subr.mxu0 0.0
  %150 = vmatpush2.msra.mxu0 0.0
  %151 = vmatprep.subr.mxu0 0.0
  %152 = vmatpush2.msra.mxu0 0.0
  %153 = vmatprep.subr.mxu0 0.0
  %154 = vmatpush2.msra.mxu0 0.0
  %155 = vmatprep.subr.mxu0 0.0
  %156 = vmatpush2.msra.mxu0 0.0
  %157 = vmatprep.subr.mxu0 0.0
  %158 = vmatpush2.msra.mxu0 0.0
  %159 = vmatprep.subr.mxu0 0.0
  %160 = vmatpush2.msra.mxu0 0.0
  %161 = vmatprep.subr.mxu0 0.0
  %162 = vmatpush2.msra.mxu0 0.0
  %163 = vmatprep.subr.mxu0 0.0
  %164 = vmatpush2.msra.mxu0 0.0
  %165 = vmatprep.subr.mxu0 0.0
  %166 = vmatpush2.msra.mxu0 0.0
  %167 = vmatprep.subr.mxu0 0.0
  %168 = vmatpush2.msra.mxu0 0.0
  %169 = vmatprep.subr.mxu0 0.0
  %170 = vmatpush2.msra.mxu0 0.0
  %171 = vmatprep.subr.mxu0 0.0
  %172 = vmatpush2.msra.mxu0 0.0
  %173 = vmatprep.subr.mxu0 0.0
  %174 = vmatpush2.msra.mxu0 0.0
  %175 = vmatprep.subr.mxu0 0.0
  %176 = vmatpush2.msra.mxu0 0.0
  %177 = vmatprep.subr.mxu0 0.0
  %178 = vmatpush2.msra.mxu0 0.0
  %179 = vmatprep.mubr.f32.mxu0 0.0
  %180 = vmatmul.mubr.f32.gmra.mxu0 %v110
  %v181 = vpop.f32.mrf.mxu0
  %v182 = vadd.f32 0.0, %v181
  %v183 = vpop.f32.mrf.mxu0
  %184 = vmatprep.mubr.f32.mxu0 0.0
  %185 = vmatmul.mubr.f32.gmra.mxu0 %v113
  %v186 = vpop.f32.mrf.mxu0
  %v187 = vadd.f32 0.0, %v186
  %v188 = vpop.f32.mrf.mxu0
  %189 = vdwg.mxu0
  %v191 = vsel %vm30, %v22, 0
  %193 = vmatprep.subr.mxu0 0.0
  %194 = vmatpush1.msra.mxu0 0.0
  %195 = vmatprep.subr.mxu0 0.0
  %196 = vmatpush1.msra.mxu0 0.0
  %197 = vmatprep.subr.mxu0 0.0
  %198 = vmatpush1.msra.mxu0 0.0
  %199 = vmatprep.subr.mxu0 0.0
  %200 = vmatpush1.msra.mxu0 0.0
  %201 = vmatprep.subr.mxu0 0.0
  %202 = vmatpush1.msra.mxu0 0.0
  %203 = vmatprep.subr.mxu0 0.0
  %204 = vmatpush1.msra.mxu0 0.0
  %205 = vmatprep.subr.mxu0 0.0
  %206 = vmatpush1.msra.mxu0 0.0
  %207 = vmatprep.subr.mxu0 0.0
  %208 = vmatpush1.msra.mxu0 0.0
  %209 = vmatprep.subr.mxu0 0.0
  %210 = vmatpush1.msra.mxu0 0.0
  %211 = vmatprep.subr.mxu0 0.0
  %212 = vmatpush1.msra.mxu0 0.0
  %213 = vmatprep.subr.mxu0 0.0
  %214 = vmatpush1.msra.mxu0 0.0
  %215 = vmatprep.subr.mxu0 0.0
  %216 = vmatpush1.msra.mxu0 0.0
  %217 = vmatprep.subr.mxu0 0.0
  %218 = vmatpush1.msra.mxu0 0.0
  %219 = vmatprep.subr.mxu0 0.0
  %220 = vmatpush1.msra.mxu0 0.0
  %221 = vmatprep.subr.mxu0 0.0
  %222 = vmatpush1.msra.mxu0 0.0
  %223 = vmatprep.subr.mxu0 0.0
  %224 = vmatpush1.msra.mxu0 %v191
  %225 = vmatprep.subr.mxu0 0.0
  %226 = vmatpush2.msra.mxu0 0.0
  %227 = vmatprep.subr.mxu0 0.0
  %228 = vmatpush2.msra.mxu0 0.0
  %229 = vmatprep.subr.mxu0 0.0
  %230 = vmatpush2.msra.mxu0 0.0
  %231 = vmatprep.subr.mxu0 0.0
  %232 = vmatpush2.msra.mxu0 0.0
  %233 = vmatprep.subr.mxu0 0.0
  %234 = vmatpush2.msra.mxu0 0.0
  %235 = vmatprep.subr.mxu0 0.0
  %236 = vmatpush2.msra.mxu0 0.0
  %237 = vmatprep.subr.mxu0 0.0
  %238 = vmatpush2.msra.mxu0 0.0
  %239 = vmatprep.subr.mxu0 0.0
  %240 = vmatpush2.msra.mxu0 0.0
  %241 = vmatprep.subr.mxu0 0.0
  %242 = vmatpush2.msra.mxu0 0.0
  %243 = vmatprep.subr.mxu0 0.0
  %244 = vmatpush2.msra.mxu0 0.0
  %245 = vmatprep.subr.mxu0 0.0
  %246 = vmatpush2.msra.mxu0 0.0
  %247 = vmatprep.subr.mxu0 0.0
  %248 = vmatpush2.msra.mxu0 0.0
  %249 = vmatprep.subr.mxu0 0.0
  %250 = vmatpush2.msra.mxu0 0.0
  %251 = vmatprep.subr.mxu0 0.0
  %252 = vmatpush2.msra.mxu0 0.0
  %253 = vmatprep.subr.mxu0 0.0
  %254 = vmatpush2.msra.mxu0 0.0
  %255 = vmatprep.subr.mxu0 0.0
  %256 = vmatpush2.msra.mxu0 0.0
  %257 = vmatprep.mubr.f32.mxu0 0.0
  %258 = vmatmul.mubr.f32.gmra.mxu0 %v25
  %v259 = vpop.f32.mrf.mxu0
  %v260 = vadd.f32 0.0, %v259
  %v261 = vpop.f32.mrf.mxu0
  %262 = vmatprep.mubr.f32.mxu0 0.0
  %263 = vmatmul.mubr.f32.gmra.mxu0 %v28
  %v264 = vpop.f32.mrf.mxu0
  %v265 = vadd.f32 0.0, %v264
  %v266 = vpop.f32.mrf.mxu0
  %267 = vdwg.mxu0
  %268 = vmatprep.subr.mxu0 0.0
  %269 = vmatpush1.msra.mxu0 0.0
  %270 = vmatprep.subr.mxu0 0.0
  %271 = vmatpush1.msra.mxu0 0.0
  %272 = vmatprep.subr.mxu0 0.0
  %273 = vmatpush1.msra.mxu0 0.0
  %274 = vmatprep.subr.mxu0 0.0
  %275 = vmatpush1.msra.mxu0 0.0
  %276 = vmatprep.subr.mxu0 0.0
  %277 = vmatpush1.msra.mxu0 0.0
  %278 = vmatprep.subr.mxu0 0.0
  %279 = vmatpush1.msra.mxu0 0.0
  %280 = vmatprep.subr.mxu0 0.0
  %281 = vmatpush1.msra.mxu0 0.0
  %282 = vmatprep.subr.mxu0 0.0
  %283 = vmatpush1.msra.mxu0 0.0
  %284 = vmatprep.subr.mxu0 0.0
  %285 = vmatpush1.msra.mxu0 0.0
  %286 = vmatprep.subr.mxu0 0.0
  %287 = vmatpush1.msra.mxu0 0.0
  %288 = vmatprep.subr.mxu0 0.0
  %289 = vmatpush1.msra.mxu0 0.0
  %290 = vmatprep.subr.mxu0 0.0
  %291 = vmatpush1.msra.mxu0 0.0
  %292 = vmatprep.subr.mxu0 0.0
  %293 = vmatpush1.msra.mxu0 0.0
  %294 = vmatprep.subr.mxu0 0.0
  %295 = vmatpush1.msra.mxu0 0.0
  %296 = vmatprep.subr.mxu0 0.0
  %297 = vmatpush1.msra.mxu0 0.0
  %298 = vmatprep.subr.mxu0 0.0
  %299 = vmatpush1.msra.mxu0 %v191
  %300 = vmatprep.subr.mxu0 0.0
  %301 = vmatpush2.msra.mxu0 0.0
  %302 = vmatprep.subr.mxu0 0.0
  %303 = vmatpush2.msra.mxu0 0.0
  %304 = vmatprep.subr.mxu0 0.0
  %305 = vmatpush2.msra.mxu0 0.0
  %306 = vmatprep.subr.mxu0 0.0
  %307 = vmatpush2.msra.mxu0 0.0
  %308 = vmatprep.subr.mxu0 0.0
  %309 = vmatpush2.msra.mxu0 0.0
  %310 = vmatprep.subr.mxu0 0.0
  %311 = vmatpush2.msra.mxu0 0.0
  %312 = vmatprep.subr.mxu0 0.0
  %313 = vmatpush2.msra.mxu0 0.0
  %314 = vmatprep.subr.mxu0 0.0
  %315 = vmatpush2.msra.mxu0 0.0
  %316 = vmatprep.subr.mxu0 0.0
  %317 = vmatpush2.msra.mxu0 0.0
  %318 = vmatprep.subr.mxu0 0.0
  %319 = vmatpush2.msra.mxu0 0.0
  %320 = vmatprep.subr.mxu0 0.0
  %321 = vmatpush2.msra.mxu0 0.0
  %322 = vmatprep.subr.mxu0 0.0
  %323 = vmatpush2.msra.mxu0 0.0
  %324 = vmatprep.subr.mxu0 0.0
  %325 = vmatpush2.msra.mxu0 0.0
  %326 = vmatprep.subr.mxu0 0.0
  %327 = vmatpush2.msra.mxu0 0.0
  %328 = vmatprep.subr.mxu0 0.0
  %329 = vmatpush2.msra.mxu0 0.0
  %330 = vmatprep.subr.mxu0 0.0
  %331 = vmatpush2.msra.mxu0 0.0
  %332 = vmatprep.mubr.f32.mxu0 0.0
  %333 = vmatmul.mubr.f32.gmra.mxu0 %v110
  %v334 = vpop.f32.mrf.mxu0
  %v335 = vadd.f32 0.0, %v334
  %v336 = vpop.f32.mrf.mxu0
  %337 = vmatprep.mubr.f32.mxu0 0.0
  %338 = vmatmul.mubr.f32.gmra.mxu0 %v113
  %v339 = vpop.f32.mrf.mxu0
  %v340 = vadd.f32 0.0, %v339
  %v341 = vpop.f32.mrf.mxu0
  %342 = vdwg.mxu0
  %v343 = vld [vmem:[%s1] sm:$0xff]
  %v344 = vld [vmem:[%s1 + $0x8] sm:$0x1]
  %v345 = vld [vmem:[%s1 + $0x10] sm:$0xff]
  %v346 = vld [vmem:[%s1 + $0x18] sm:$0x1]
  %vm347 = vcmask 130048
  %v349 = vsel %vm347, %v101, 0
  %v352 = vsel %vm347, %v106, 0
  %v355 = vsel %vm347, %v260, 0
  %v358 = vsel %vm347, %v265, 0
  %360 = vmatprep.subr.mxu0 0.0
  %361 = vmatpush1.xpose.msra.mxu0 0.0
  %362 = vmatprep.subr.mxu0 0.0
  %363 = vmatpush1.xpose.msra.mxu0 0.0
  %364 = vmatprep.subr.mxu0 0.0
  %365 = vmatpush1.xpose.msra.mxu0 0.0
  %366 = vmatprep.subr.mxu0 0.0
  %367 = vmatpush1.xpose.msra.mxu0 0.0
  %368 = vmatprep.subr.mxu0 0.0
  %369 = vmatpush1.xpose.msra.mxu0 0.0
  %370 = vmatprep.subr.mxu0 0.0
  %371 = vmatpush1.xpose.msra.mxu0 0.0
  %372 = vmatprep.subr.mxu0 0.0
  %373 = vmatpush1.xpose.msra.mxu0 0.0
  %374 = vmatprep.subr.mxu0 0.0
  %375 = vmatpush1.xpose.msra.mxu0 0.0
  %376 = vmatprep.subr.mxu0 0.0
  %377 = vmatpush1.xpose.msra.mxu0 0.0
  %378 = vmatprep.subr.mxu0 0.0
  %379 = vmatpush1.xpose.msra.mxu0 0.0
  %380 = vmatprep.subr.mxu0 0.0
  %381 = vmatpush1.xpose.msra.mxu0 0.0
  %382 = vmatprep.subr.mxu0 0.0
  %383 = vmatpush1.xpose.msra.mxu0 0.0
  %384 = vmatprep.subr.mxu0 0.0
  %385 = vmatpush1.xpose.msra.mxu0 0.0
  %386 = vmatprep.subr.mxu0 0.0
  %387 = vmatpush1.xpose.msra.mxu0 0.0
  %388 = vmatprep.subr.mxu0 0.0
  %389 = vmatpush1.xpose.msra.mxu0 %v358
  %390 = vmatprep.subr.mxu0 0.0
  %391 = vmatpush1.xpose.msra.mxu0 %v355
  %392 = vmatprep.subr.mxu0 0.0
  %393 = vmatpush2.xpose.msra.mxu0 0.0
  %394 = vmatprep.subr.mxu0 0.0
  %395 = vmatpush2.xpose.msra.mxu0 0.0
  %396 = vmatprep.subr.mxu0 0.0
  %397 = vmatpush2.xpose.msra.mxu0 0.0
  %398 = vmatprep.subr.mxu0 0.0
  %399 = vmatpush2.xpose.msra.mxu0 0.0
  %400 = vmatprep.subr.mxu0 0.0
  %401 = vmatpush2.xpose.msra.mxu0 0.0
  %402 = vmatprep.subr.mxu0 0.0
  %403 = vmatpush2.xpose.msra.mxu0 0.0
  %404 = vmatprep.subr.mxu0 0.0
  %405 = vmatpush2.xpose.msra.mxu0 0.0
  %406 = vmatprep.subr.mxu0 0.0
  %407 = vmatpush2.xpose.msra.mxu0 0.0
  %408 = vmatprep.subr.mxu0 0.0
  %409 = vmatpush2.xpose.msra.mxu0 0.0
  %410 = vmatprep.subr.mxu0 0.0
  %411 = vmatpush2.xpose.msra.mxu0 0.0
  %412 = vmatprep.subr.mxu0 0.0
  %413 = vmatpush2.xpose.msra.mxu0 0.0
  %414 = vmatprep.subr.mxu0 0.0
  %415 = vmatpush2.xpose.msra.mxu0 0.0
  %416 = vmatprep.subr.mxu0 0.0
  %417 = vmatpush2.xpose.msra.mxu0 0.0
  %418 = vmatprep.subr.mxu0 0.0
  %419 = vmatpush2.xpose.msra.mxu0 0.0
  %420 = vmatprep.subr.mxu0 0.0
  %421 = vmatpush2.xpose.msra.mxu0 0.0
  %422 = vmatprep.subr.mxu0 0.0
  %423 = vmatpush2.xpose.msra.mxu0 0.0
  %424 = vmatprep.mubr.f32.mxu0 0.0
  %425 = vmatmul.mubr.f32.gmra.mxu0 %v349
  %v426 = vpop.f32.mrf.mxu0
  %v427 = vadd.f32 %v343, %v426
  %v428 = vpop.f32.mrf.mxu0
  %429 = vmatprep.mubr.f32.mxu0 0.0
  %430 = vmatmul.mubr.f32.gmra.mxu0 %v352
  %v431 = vpop.f32.mrf.mxu0
  %v432 = vadd.f32 %v344, %v431
  %v433 = vpop.f32.mrf.mxu0
  %434 = vdwg.mxu0
  %v436 = vsel %vm347, %v182, 0
  %v439 = vsel %vm347, %v187, 0
  %v442 = vsel %vm347, %v335, 0
  %v445 = vsel %vm347, %v340, 0
  %447 = vmatprep.subr.mxu0 0.0
  %448 = vmatpush1.xpose.msra.mxu0 0.0
  %449 = vmatprep.subr.mxu0 0.0
  %450 = vmatpush1.xpose.msra.mxu0 0.0
  %451 = vmatprep.subr.mxu0 0.0
  %452 = vmatpush1.xpose.msra.mxu0 0.0
  %453 = vmatprep.subr.mxu0 0.0
  %454 = vmatpush1.xpose.msra.mxu0 0.0
  %455 = vmatprep.subr.mxu0 0.0
  %456 = vmatpush1.xpose.msra.mxu0 0.0
  %457 = vmatprep.subr.mxu0 0.0
  %458 = vmatpush1.xpose.msra.mxu0 0.0
  %459 = vmatprep.subr.mxu0 0.0
  %460 = vmatpush1.xpose.msra.mxu0 0.0
  %461 = vmatprep.subr.mxu0 0.0
  %462 = vmatpush1.xpose.msra.mxu0 0.0
  %463 = vmatprep.subr.mxu0 0.0
  %464 = vmatpush1.xpose.msra.mxu0 0.0
  %465 = vmatprep.subr.mxu0 0.0
  %466 = vmatpush1.xpose.msra.mxu0 0.0
  %467 = vmatprep.subr.mxu0 0.0
  %468 = vmatpush1.xpose.msra.mxu0 0.0
  %469 = vmatprep.subr.mxu0 0.0
  %470 = vmatpush1.xpose.msra.mxu0 0.0
  %471 = vmatprep.subr.mxu0 0.0
  %472 = vmatpush1.xpose.msra.mxu0 0.0
  %473 = vmatprep.subr.mxu0 0.0
  %474 = vmatpush1.xpose.msra.mxu0 0.0
  %475 = vmatprep.subr.mxu0 0.0
  %476 = vmatpush1.xpose.msra.mxu0 %v445
  %477 = vmatprep.subr.mxu0 0.0
  %478 = vmatpush1.xpose.msra.mxu0 %v442
  %479 = vmatprep.subr.mxu0 0.0
  %480 = vmatpush2.xpose.msra.mxu0 0.0
  %481 = vmatprep.subr.mxu0 0.0
  %482 = vmatpush2.xpose.msra.mxu0 0.0
  %483 = vmatprep.subr.mxu0 0.0
  %484 = vmatpush2.xpose.msra.mxu0 0.0
  %485 = vmatprep.subr.mxu0 0.0
  %486 = vmatpush2.xpose.msra.mxu0 0.0
  %487 = vmatprep.subr.mxu0 0.0
  %488 = vmatpush2.xpose.msra.mxu0 0.0
  %489 = vmatprep.subr.mxu0 0.0
  %490 = vmatpush2.xpose.msra.mxu0 0.0
  %491 = vmatprep.subr.mxu0 0.0
  %492 = vmatpush2.xpose.msra.mxu0 0.0
  %493 = vmatprep.subr.mxu0 0.0
  %494 = vmatpush2.xpose.msra.mxu0 0.0
  %495 = vmatprep.subr.mxu0 0.0
  %496 = vmatpush2.xpose.msra.mxu0 0.0
  %497 = vmatprep.subr.mxu0 0.0
  %498 = vmatpush2.xpose.msra.mxu0 0.0
  %499 = vmatprep.subr.mxu0 0.0
  %500 = vmatpush2.xpose.msra.mxu0 0.0
  %501 = vmatprep.subr.mxu0 0.0
  %502 = vmatpush2.xpose.msra.mxu0 0.0
  %503 = vmatprep.subr.mxu0 0.0
  %504 = vmatpush2.xpose.msra.mxu0 0.0
  %505 = vmatprep.subr.mxu0 0.0
  %506 = vmatpush2.xpose.msra.mxu0 0.0
  %507 = vmatprep.subr.mxu0 0.0
  %508 = vmatpush2.xpose.msra.mxu0 0.0
  %509 = vmatprep.subr.mxu0 0.0
  %510 = vmatpush2.xpose.msra.mxu0 0.0
  %511 = vmatprep.mubr.f32.mxu0 0.0
  %512 = vmatmul.mubr.f32.gmra.mxu0 %v436
  %v513 = vpop.f32.mrf.mxu0
  %v514 = vadd.f32 %v345, %v513
  %v515 = vpop.f32.mrf.mxu0
  %516 = vmatprep.mubr.f32.mxu0 0.0
  %517 = vmatmul.mubr.f32.gmra.mxu0 %v439
  %v518 = vpop.f32.mrf.mxu0
  %v519 = vadd.f32 %v346, %v518
  %v520 = vpop.f32.mrf.mxu0
  %521 = vdwg.mxu0
  %vm522 = vcmask 72704
  %v523 = vsel %vm522, %v427, -inf
  %524 = vmax.xlane.f32.xlu0 %v523
  %v525 = vpop.xlane.xlu0 %524
  %vm526 = vcmask 65536
  %v527 = vsel %vm526, %v432, -inf
  %528 = vmax.xlane.f32.xlu0 %v527
  %v529 = vpop.xlane.xlu0 %528
  %v530 = vsel %vm522, %v514, -inf
  %531 = vmax.xlane.f32.xlu0 %v530
  %v532 = vpop.xlane.xlu0 %531
  %v533 = vsel %vm526, %v519, -inf
  %534 = vmax.xlane.f32.xlu0 %v533
  %v535 = vpop.xlane.xlu0 %534
  %v536 = vsub.f32 %v427, %v525
  %v537 = vsub.f32 %v432, %v529
  %v538 = vsub.f32 %v514, %v532
  %v539 = vsub.f32 %v519, %v535
  %v540 = vmul.f32 %v536, 1.442695
  %v541 = vpow.pop %v540
  %v542 = vmul.f32 %v537, 1.442695
  %v543 = vpow.pop %v542
  %v544 = vmul.f32 %v538, 1.442695
  %v545 = vpow.pop %v544
  %v546 = vmul.f32 %v539, 1.442695
  %v547 = vpow.pop %v546
  %v548 = vsel %vm522, %v541, 0.0
  %549 = vadd.xlane.f32.xlu0 %v548
  %v550 = vpop.xlane.xlu0 %549
  %v551 = vsel %vm526, %v543, 0.0
  %552 = vadd.xlane.f32.xlu0 %v551
  %v553 = vpop.xlane.xlu0 %552
  %v554 = vsel %vm522, %v545, 0.0
  %555 = vadd.xlane.f32.xlu0 %v554
  %v556 = vpop.xlane.xlu0 %555
  %v557 = vsel %vm526, %v547, 0.0
  %558 = vadd.xlane.f32.xlu0 %v557
  %v559 = vpop.xlane.xlu0 %558
  %v560 = vrcp.pop %v550
  %v561 = vmul.f32 %v541, %v560
  %v562 = vrcp.pop %v553
  %v563 = vmul.f32 %v543, %v562
  %v564 = vrcp.pop %v556
  %v565 = vmul.f32 %v545, %v564
  %v566 = vrcp.pop %v559
  %v567 = vmul.f32 %v547, %v566
  %568 = vst.msk [vmem:[%s4] sm:$0xff] %vm522, %v561
  %569 = vst.msk [vmem:[%s4 + $0x8] sm:$0x1] %vm526, %v563
  %570 = vst.msk [vmem:[%s4 + $0x10] sm:$0xff] %vm522, %v565
  %571 = vst.msk [vmem:[%s4 + $0x18] sm:$0x1] %vm526, %v567
  // Predicated region
  $region18: #{dcn_forward.4} parent=0 // pred_check
    _
  $region19: #{dcn_forward.4} parent=0 // pred_check_branch
    %573 = sbr.rel (0) target = $region21
  $region20: #{dcn_forward.4} parent=0 // pred_region
    _
  $region21: #{dcn_forward.4} parent=0 // pred_fallthru
    _
  // Predicated region
  $region22: #{dcn_forward.4} parent=0 // pred_check
    _
  $region23: #{dcn_forward.4} parent=0 // pred_check_branch
    %575 = sbr.rel (0) target = $region25
  $region24: #{dcn_forward.4} parent=0 // pred_region
    _
  $region25: #{dcn_forward.4} parent=0 // pred_fallthru
    _

// kernel: dcn_forward.3
$region0: #{dcn_forward.3}
  #allocation0 [shape = 'u32[]', space=smem, size = 0x4, offset = 0x4, fixed_abs, tag = 'smem constant byte address 0x4 - core index']
  #allocation1 [shape = 'u32[144,128]{1,0:T(1,128)}', space=vmem, size = 0x12000, scoped, tag = 'internal scratch']
  %s0 = inlined_call_operand.vmem [shape: f32[2,8,2], index: 0, kind: input, shape index: {}]
  %s1 = inlined_call_operand.vmem [shape: f32[2,8], index: 1, kind: input, shape index: {}, may-alias: {1,3}]
  %s2 = inlined_call_operand.vmem [shape: f32[2,8,1], index: 2, kind: input, shape index: {}]
  %s3 = inlined_call_operand.vmem [shape: f32[2,1,8], index: 3, kind: input, shape index: {}, may-alias: {1,3}]
  %s4 = inlined_call_operand.vmem [shape: f32[2,2,8], index: 4, kind: input, shape index: {}]
  %s5 = inlined_call_operand.vmem [shape: f32[2,2], index: 5, kind: input, shape index: {}]
  %s6 = inlined_call_operand.vmem [shape: f32[1,1,2], index: 6, kind: input, shape index: {}]
  %s7 = inlined_call_operand.vmem [shape: f32[2,8,8], index: 7, kind: output, shape index: {0}]
  %s8 = inlined_call_operand.vmem [shape: f32[2,8,2], index: 8, kind: output, shape index: {1}]
  %s9 = inlined_call_operand.hbm [shape: f32[2,2,8], index: 9, kind: output, shape index: {2}]
  %s10 = inlined_call_operand.hbm [shape: f32[2,8], index: 10, kind: output, shape index: {3}]
  %s11 = inlined_call_operand.hbm [shape: f32[1,1], index: 11, kind: output, shape index: {4}]
  %s12 = inlined_call_operand.vmem [shape: f32[2,2,1], index: 12, kind: output, shape index: {5}]
  %13 = xla_tuple %s7, %s8, %s9, %s10, %s11, %s12
  %s14 = sld [smem:[#allocation0]]
  $region78: #{dcn_forward.3} parent=0
    _
  %s16 = ssub.s32 1, %s14
  %s17 = scalar_select 0, %s16, %s14
  $region1: #{dcn_forward.3} parent=0
    #allocation2 [shape = 'u8[2048]{0}', space=vmem, size = 0x800, scoped, tag = 'output window, operand 2, single buffered']
    #allocation3 [shape = 's32[1]{0}', space=sflag, size = 0x4, scoped, tag = 'scoped memory for dcn_forward.3']
    #allocation4 [shape = 'u8[1024]{0}', space=vmem, size = 0x400, scoped, tag = 'output window, operand 3, single buffered']
    #allocation5 [shape = 's32[1]{0}', space=sflag, size = 0x4, scoped, tag = 'scoped memory for dcn_forward.3']
    #allocation6 [shape = 'u8[512]{0}', space=vmem, size = 0x400, scoped, tag = 'output window, operand 4, single buffered']
    %18 = vsyncpa [#allocation3], 0
    %19 = vsyncpa [#allocation5], 0
    // Predicated region
    $region2: #{dcn_forward.3} parent=1 // pred_check
      _
    $region3: #{dcn_forward.3} parent=1 // pred_check_branch
      %21 = sbr.rel (0) target = $region5
    $region4: #{dcn_forward.3} parent=1 // pred_region
      _
    $region5: #{dcn_forward.3} parent=1 // pred_fallthru
      _
    // Predicated region
    $region6: #{dcn_forward.3} parent=1 // pred_check
      _
    $region7: #{dcn_forward.3} parent=1 // pred_check_branch
      %23 = sbr.rel (0) target = $region9
    $region8: #{dcn_forward.3} parent=1 // pred_region
      _
    $region9: #{dcn_forward.3} parent=1 // pred_fallthru
      _
    // Predicated region
    $region10: #{dcn_forward.3} parent=1 // pred_check
      _
    $region11: #{dcn_forward.3} parent=1 // pred_check_branch
      %25 = sbr.rel (0) target = $region13
    $region12: #{dcn_forward.3} parent=1 // pred_region
      _
    $region13: #{dcn_forward.3} parent=1 // pred_fallthru
      _
    // Predicated region
    $region14: #{dcn_forward.3} parent=1 // pred_check
      _
    $region15: #{dcn_forward.3} parent=1 // pred_check_branch
      %27 = sbr.rel (0) target = $region17
    $region16: #{dcn_forward.3} parent=1 // pred_region
      _
    $region17: #{dcn_forward.3} parent=1 // pred_fallthru
      _
    // Predicated region
    $region18: #{dcn_forward.3} parent=1 // pred_check
      _
    $region19: #{dcn_forward.3} parent=1 // pred_check_branch
      %29 = sbr.rel (0) target = $region21
    $region20: #{dcn_forward.3} parent=1 // pred_region
      _
    $region21: #{dcn_forward.3} parent=1 // pred_fallthru
      _
    // Predicated region
    $region22: #{dcn_forward.3} parent=1 // pred_check
      _
    $region23: #{dcn_forward.3} parent=1 // pred_check_branch
      %31 = sbr.rel (0) target = $region25
    $region24: #{dcn_forward.3} parent=1 // pred_region
      _
    $region25: #{dcn_forward.3} parent=1 // pred_fallthru
      _
    // Predicated region
    $region26: #{dcn_forward.3} parent=1 // pred_check
      _
    $region27: #{dcn_forward.3} parent=1 // pred_check_branch
      %33 = sbr.rel (0) target = $region29
    $region28: #{dcn_forward.3} parent=1 // pred_region
      _
    $region29: #{dcn_forward.3} parent=1 // pred_fallthru
      _
    %v34 = vld [vmem:[%s0] sm:$0xff]
    %v35 = vld [vmem:[%s0 + $0x8] sm:$0xff]
    %v36 = vld [vmem:[%s1] sm:$0x3]
    %v37 = vld [vmem:[%s2] sm:$0xff]
    %v38 = vld [vmem:[%s2 + $0x8] sm:$0xff]
    %v39 = vld [vmem:[%s3] sm:$0x1]
    %v40 = vld [vmem:[%s3 + $0x1] sm:$0x1]
    %vm41 = vcmask 58368
    %v42 = vsel %vm41, %v36, 0.0
    %43 = vadd.xlane.f32.xlu0 %v42
    %v44 = vpop.xlane.xlu0 %43
    %v45 = vmax.f32 %v44, 1.0
    %v46 = vld [vmem:[%s5] sm:$0x3]
    %vm47 = vcmask 15360
    %v49 = vsel %vm47, %v34, 0
    %vm51 = vcmask 1041408
    %v53 = vsel %vm51, %v46, 0
    %55 = vmatprep.subr.mxu0 0.0
    %56 = vmatpush1.msra.mxu0 0.0
    %57 = vmatprep.subr.mxu0 0.0
    %58 = vmatpush1.msra.mxu0 0.0
    %59 = vmatprep.subr.mxu0 0.0
    %60 = vmatpush1.msra.mxu0 0.0
    %61 = vmatprep.subr.mxu0 0.0
    %62 = vmatpush1.msra.mxu0 0.0
    %63 = vmatprep.subr.mxu0 0.0
    %64 = vmatpush1.msra.mxu0 0.0
    %65 = vmatprep.subr.mxu0 0.0
    %66 = vmatpush1.msra.mxu0 0.0
    %67 = vmatprep.subr.mxu0 0.0
    %68 = vmatpush1.msra.mxu0 0.0
    %69 = vmatprep.subr.mxu0 0.0
    %70 = vmatpush1.msra.mxu0 0.0
    %71 = vmatprep.subr.mxu0 0.0
    %72 = vmatpush1.msra.mxu0 0.0
    %73 = vmatprep.subr.mxu0 0.0
    %74 = vmatpush1.msra.mxu0 0.0
    %75 = vmatprep.subr.mxu0 0.0
    %76 = vmatpush1.msra.mxu0 0.0
    %77 = vmatprep.subr.mxu0 0.0
    %78 = vmatpush1.msra.mxu0 0.0
    %79 = vmatprep.subr.mxu0 0.0
    %80 = vmatpush1.msra.mxu0 0.0
    %81 = vmatprep.subr.mxu0 0.0
    %82 = vmatpush1.msra.mxu0 0.0
    %83 = vmatprep.subr.mxu0 0.0
    %84 = vmatpush1.msra.mxu0 0.0
    %85 = vmatprep.subr.mxu0 0.0
    %86 = vmatpush1.msra.mxu0 %v53
    %87 = vmatprep.subr.mxu0 0.0
    %88 = vmatpush2.msra.mxu0 0.0
    %89 = vmatprep.subr.mxu0 0.0
    %90 = vmatpush2.msra.mxu0 0.0
    %91 = vmatprep.subr.mxu0 0.0
    %92 = vmatpush2.msra.mxu0 0.0
    %93 = vmatprep.subr.mxu0 0.0
    %94 = vmatpush2.msra.mxu0 0.0
    %95 = vmatprep.subr.mxu0 0.0
    %96 = vmatpush2.msra.mxu0 0.0
    %97 = vmatprep.subr.mxu0 0.0
    %98 = vmatpush2.msra.mxu0 0.0
    %99 = vmatprep.subr.mxu0 0.0
    %100 = vmatpush2.msra.mxu0 0.0
    %101 = vmatprep.subr.mxu0 0.0
    %102 = vmatpush2.msra.mxu0 0.0
    %103 = vmatprep.subr.mxu0 0.0
    %104 = vmatpush2.msra.mxu0 0.0
    %105 = vmatprep.subr.mxu0 0.0
    %106 = vmatpush2.msra.mxu0 0.0
    %107 = vmatprep.subr.mxu0 0.0
    %108 = vmatpush2.msra.mxu0 0.0
    %109 = vmatprep.subr.mxu0 0.0
    %110 = vmatpush2.msra.mxu0 0.0
    %111 = vmatprep.subr.mxu0 0.0
    %112 = vmatpush2.msra.mxu0 0.0
    %113 = vmatprep.subr.mxu0 0.0
    %114 = vmatpush2.msra.mxu0 0.0
    %115 = vmatprep.subr.mxu0 0.0
    %116 = vmatpush2.msra.mxu0 0.0
    %117 = vmatprep.subr.mxu0 0.0
    %118 = vmatpush2.msra.mxu0 0.0
    %119 = vmatprep.mubr.f32.mxu0 0.0
    %120 = vmatmul.mubr.f32.gmra.mxu0 %v49
    %v121 = vpop.f32.mrf.mxu0
    %v122 = vadd.f32 0.0, %v121
    %v123 = vpop.f32.mrf.mxu0
    %124 = vdwg.mxu0
    %v126 = vsel %vm47, %v35, 0
    %128 = vmatprep.subr.mxu0 0.0
    %129 = vmatpush1.msra.mxu0 0.0
    %130 = vmatprep.subr.mxu0 0.0
    %131 = vmatpush1.msra.mxu0 0.0
    %132 = vmatprep.subr.mxu0 0.0
    %133 = vmatpush1.msra.mxu0 0.0
    %134 = vmatprep.subr.mxu0 0.0
    %135 = vmatpush1.msra.mxu0 0.0
    %136 = vmatprep.subr.mxu0 0.0
    %137 = vmatpush1.msra.mxu0 0.0
    %138 = vmatprep.subr.mxu0 0.0
    %139 = vmatpush1.msra.mxu0 0.0
    %140 = vmatprep.subr.mxu0 0.0
    %141 = vmatpush1.msra.mxu0 0.0
    %142 = vmatprep.subr.mxu0 0.0
    %143 = vmatpush1.msra.mxu0 0.0
    %144 = vmatprep.subr.mxu0 0.0
    %145 = vmatpush1.msra.mxu0 0.0
    %146 = vmatprep.subr.mxu0 0.0
    %147 = vmatpush1.msra.mxu0 0.0
    %148 = vmatprep.subr.mxu0 0.0
    %149 = vmatpush1.msra.mxu0 0.0
    %150 = vmatprep.subr.mxu0 0.0
    %151 = vmatpush1.msra.mxu0 0.0
    %152 = vmatprep.subr.mxu0 0.0
    %153 = vmatpush1.msra.mxu0 0.0
    %154 = vmatprep.subr.mxu0 0.0
    %155 = vmatpush1.msra.mxu0 0.0
    %156 = vmatprep.subr.mxu0 0.0
    %157 = vmatpush1.msra.mxu0 0.0
    %158 = vmatprep.subr.mxu0 0.0
    %159 = vmatpush1.msra.mxu0 %v53
    %160 = vmatprep.subr.mxu0 0.0
    %161 = vmatpush2.msra.mxu0 0.0
    %162 = vmatprep.subr.mxu0 0.0
    %163 = vmatpush2.msra.mxu0 0.0
    %164 = vmatprep.subr.mxu0 0.0
    %165 = vmatpush2.msra.mxu0 0.0
    %166 = vmatprep.subr.mxu0 0.0
    %167 = vmatpush2.msra.mxu0 0.0
    %168 = vmatprep.subr.mxu0 0.0
    %169 = vmatpush2.msra.mxu0 0.0
    %170 = vmatprep.subr.mxu0 0.0
    %171 = vmatpush2.msra.mxu0 0.0
    %172 = vmatprep.subr.mxu0 0.0
    %173 = vmatpush2.msra.mxu0 0.0
    %174 = vmatprep.subr.mxu0 0.0
    %175 = vmatpush2.msra.mxu0 0.0
    %176 = vmatprep.subr.mxu0 0.0
    %177 = vmatpush2.msra.mxu0 0.0
    %178 = vmatprep.subr.mxu0 0.0
    %179 = vmatpush2.msra.mxu0 0.0
    %180 = vmatprep.subr.mxu0 0.0
    %181 = vmatpush2.msra.mxu0 0.0
    %182 = vmatprep.subr.mxu0 0.0
    %183 = vmatpush2.msra.mxu0 0.0
    %184 = vmatprep.subr.mxu0 0.0
    %185 = vmatpush2.msra.mxu0 0.0
    %186 = vmatprep.subr.mxu0 0.0
    %187 = vmatpush2.msra.mxu0 0.0
    %188 = vmatprep.subr.mxu0 0.0
    %189 = vmatpush2.msra.mxu0 0.0
    %190 = vmatprep.subr.mxu0 0.0
    %191 = vmatpush2.msra.mxu0 0.0
    %192 = vmatprep.mubr.f32.mxu0 0.0
    %193 = vmatmul.mubr.f32.gmra.mxu0 %v126
    %v194 = vpop.f32.mrf.mxu0
    %v195 = vadd.f32 0.0, %v194
    %v196 = vpop.f32.mrf.mxu0
    %197 = vdwg.mxu0
    %v198 = vsub.f32 %v39, 1.0
    %v199 = vsub.f32 %v40, 1.0
    %v200 = vmul.f32 %v198, 1e+09
    %v201 = vmul.f32 %v199, 1e+09
    %v204 = vlaneseq
    %v205 = vshrl.u32 %v204, 7
    %v206 = vsub.s32 0, %v205
    %v207 = vrot.slane %v200, %v206
    %v208 = vlaneseq
    %v209 = vshrl.u32 %v208, 7
    %v210 = vsub.s32 0, %v209
    %v211 = vrot.slane %v201, %v210
    %v215 = vsel %vm47, %v122, 0
    %217 = vmatprep.subr.mxu0 0.0
    %218 = vmatpush1.xpose.msra.mxu0 0.0
    %219 = vmatprep.subr.mxu0 0.0
    %220 = vmatpush1.xpose.msra.mxu0 0.0
    %221 = vmatprep.subr.mxu0 0.0
    %222 = vmatpush1.xpose.msra.mxu0 0.0
    %223 = vmatprep.subr.mxu0 0.0
    %224 = vmatpush1.xpose.msra.mxu0 0.0
    %225 = vmatprep.subr.mxu0 0.0
    %226 = vmatpush1.xpose.msra.mxu0 0.0
    %227 = vmatprep.subr.mxu0 0.0
    %228 = vmatpush1.xpose.msra.mxu0 0.0
    %229 = vmatprep.subr.mxu0 0.0
    %230 = vmatpush1.xpose.msra.mxu0 0.0
    %231 = vmatprep.subr.mxu0 0.0
    %232 = vmatpush1.xpose.msra.mxu0 0.0
    %233 = vmatprep.subr.mxu0 0.0
    %234 = vmatpush1.xpose.msra.mxu0 0.0
    %235 = vmatprep.subr.mxu0 0.0
    %236 = vmatpush1.xpose.msra.mxu0 0.0
    %237 = vmatprep.subr.mxu0 0.0
    %238 = vmatpush1.xpose.msra.mxu0 0.0
    %239 = vmatprep.subr.mxu0 0.0
    %240 = vmatpush1.xpose.msra.mxu0 0.0
    %241 = vmatprep.subr.mxu0 0.0
    %242 = vmatpush1.xpose.msra.mxu0 0.0
    %243 = vmatprep.subr.mxu0 0.0
    %244 = vmatpush1.xpose.msra.mxu0 0.0
    %245 = vmatprep.subr.mxu0 0.0
    %246 = vmatpush1.xpose.msra.mxu0 0.0
    %247 = vmatprep.subr.mxu0 0.0
    %248 = vmatpush1.xpose.msra.mxu0 %v49
    %249 = vmatprep.subr.mxu0 0.0
    %250 = vmatpush2.xpose.msra.mxu0 0.0
    %251 = vmatprep.subr.mxu0 0.0
    %252 = vmatpush2.xpose.msra.mxu0 0.0
    %253 = vmatprep.subr.mxu0 0.0
    %254 = vmatpush2.xpose.msra.mxu0 0.0
    %255 = vmatprep.subr.mxu0 0.0
    %256 = vmatpush2.xpose.msra.mxu0 0.0
    %257 = vmatprep.subr.mxu0 0.0
    %258 = vmatpush2.xpose.msra.mxu0 0.0
    %259 = vmatprep.subr.mxu0 0.0
    %260 = vmatpush2.xpose.msra.mxu0 0.0
    %261 = vmatprep.subr.mxu0 0.0
    %262 = vmatpush2.xpose.msra.mxu0 0.0
    %263 = vmatprep.subr.mxu0 0.0
    %264 = vmatpush2.xpose.msra.mxu0 0.0
    %265 = vmatprep.subr.mxu0 0.0
    %266 = vmatpush2.xpose.msra.mxu0 0.0
    %267 = vmatprep.subr.mxu0 0.0
    %268 = vmatpush2.xpose.msra.mxu0 0.0
    %269 = vmatprep.subr.mxu0 0.0
    %270 = vmatpush2.xpose.msra.mxu0 0.0
    %271 = vmatprep.subr.mxu0 0.0
    %272 = vmatpush2.xpose.msra.mxu0 0.0
    %273 = vmatprep.subr.mxu0 0.0
    %274 = vmatpush2.xpose.msra.mxu0 0.0
    %275 = vmatprep.subr.mxu0 0.0
    %276 = vmatpush2.xpose.msra.mxu0 0.0
    %277 = vmatprep.subr.mxu0 0.0
    %278 = vmatpush2.xpose.msra.mxu0 0.0
    %279 = vmatprep.subr.mxu0 0.0
    %280 = vmatpush2.xpose.msra.mxu0 0.0
    %281 = vmatprep.mubr.f32.mxu0 0.0
    %282 = vmatmul.mubr.f32.gmra.mxu0 %v215
    %v283 = vpop.f32.mrf.mxu0
    %v284 = vadd.f32 %v207, %v283
    %v285 = vpop.f32.mrf.mxu0
    %286 = vdwg.mxu0
    %v288 = vsel %vm47, %v195, 0
    %290 = vmatprep.subr.mxu0 0.0
    %291 = vmatpush1.xpose.msra.mxu0 0.0
    %292 = vmatprep.subr.mxu0 0.0
    %293 = vmatpush1.xpose.msra.mxu0 0.0
    %294 = vmatprep.subr.mxu0 0.0
    %295 = vmatpush1.xpose.msra.mxu0 0.0
    %296 = vmatprep.subr.mxu0 0.0
    %297 = vmatpush1.xpose.msra.mxu0 0.0
    %298 = vmatprep.subr.mxu0 0.0
    %299 = vmatpush1.xpose.msra.mxu0 0.0
    %300 = vmatprep.subr.mxu0 0.0
    %301 = vmatpush1.xpose.msra.mxu0 0.0
    %302 = vmatprep.subr.mxu0 0.0
    %303 = vmatpush1.xpose.msra.mxu0 0.0
    %304 = vmatprep.subr.mxu0 0.0
    %305 = vmatpush1.xpose.msra.mxu0 0.0
    %306 = vmatprep.subr.mxu0 0.0
    %307 = vmatpush1.xpose.msra.mxu0 0.0
    %308 = vmatprep.subr.mxu0 0.0
    %309 = vmatpush1.xpose.msra.mxu0 0.0
    %310 = vmatprep.subr.mxu0 0.0
    %311 = vmatpush1.xpose.msra.mxu0 0.0
    %312 = vmatprep.subr.mxu0 0.0
    %313 = vmatpush1.xpose.msra.mxu0 0.0
    %314 = vmatprep.subr.mxu0 0.0
    %315 = vmatpush1.xpose.msra.mxu0 0.0
    %316 = vmatprep.subr.mxu0 0.0
    %317 = vmatpush1.xpose.msra.mxu0 0.0
    %318 = vmatprep.subr.mxu0 0.0
    %319 = vmatpush1.xpose.msra.mxu0 0.0
    %320 = vmatprep.subr.mxu0 0.0
    %321 = vmatpush1.xpose.msra.mxu0 %v126
    %322 = vmatprep.subr.mxu0 0.0
    %323 = vmatpush2.xpose.msra.mxu0 0.0
    %324 = vmatprep.subr.mxu0 0.0
    %325 = vmatpush2.xpose.msra.mxu0 0.0
    %326 = vmatprep.subr.mxu0 0.0
    %327 = vmatpush2.xpose.msra.mxu0 0.0
    %328 = vmatprep.subr.mxu0 0.0
    %329 = vmatpush2.xpose.msra.mxu0 0.0
    %330 = vmatprep.subr.mxu0 0.0
    %331 = vmatpush2.xpose.msra.mxu0 0.0
    %332 = vmatprep.subr.mxu0 0.0
    %333 = vmatpush2.xpose.msra.mxu0 0.0
    %334 = vmatprep.subr.mxu0 0.0
    %335 = vmatpush2.xpose.msra.mxu0 0.0
    %336 = vmatprep.subr.mxu0 0.0
    %337 = vmatpush2.xpose.msra.mxu0 0.0
    %338 = vmatprep.subr.mxu0 0.0
    %339 = vmatpush2.xpose.msra.mxu0 0.0
    %340 = vmatprep.subr.mxu0 0.0
    %341 = vmatpush2.xpose.msra.mxu0 0.0
    %342 = vmatprep.subr.mxu0 0.0
    %343 = vmatpush2.xpose.msra.mxu0 0.0
    %344 = vmatprep.subr.mxu0 0.0
    %345 = vmatpush2.xpose.msra.mxu0 0.0
    %346 = vmatprep.subr.mxu0 0.0
    %347 = vmatpush2.xpose.msra.mxu0 0.0
    %348 = vmatprep.subr.mxu0 0.0
    %349 = vmatpush2.xpose.msra.mxu0 0.0
    %350 = vmatprep.subr.mxu0 0.0
    %351 = vmatpush2.xpose.msra.mxu0 0.0
    %352 = vmatprep.subr.mxu0 0.0
    %353 = vmatpush2.xpose.msra.mxu0 0.0
    %354 = vmatprep.mubr.f32.mxu0 0.0
    %355 = vmatmul.mubr.f32.gmra.mxu0 %v288
    %v356 = vpop.f32.mrf.mxu0
    %v357 = vadd.f32 %v211, %v356
    %v358 = vpop.f32.mrf.mxu0
    %359 = vdwg.mxu0
    %vm360 = vcmask 64512
    %v361 = vsel %vm360, %v284, -inf
    %362 = vmax.xlane.f32.xlu0 %v361
    %v363 = vpop.xlane.xlu0 %362
    %v364 = vsel %vm360, %v357, -inf
    %365 = vmax.xlane.f32.xlu0 %v364
    %v366 = vpop.xlane.xlu0 %365
    %v367 = vsub.f32 %v284, %v363
    %v368 = vsub.f32 %v357, %v366
    %v369 = vmul.f32 %v367, 1.442695
    %v370 = vpow.pop %v369
    %v371 = vmul.f32 %v368, 1.442695
    %v372 = vpow.pop %v371
    %v373 = vsel %vm360, %v370, 0.0
    %374 = vadd.xlane.f32.xlu0 %v373
    %v375 = vpop.xlane.xlu0 %374
    %v376 = vsel %vm360, %v372, 0.0
    %377 = vadd.xlane.f32.xlu0 %v376
    %v378 = vpop.xlane.xlu0 %377
    %v379 = vrcp.pop %v375
    %v380 = vmul.f32 %v370, %v379
    %v381 = vrcp.pop %v378
    %v382 = vmul.f32 %v372, %v381
    %384 = vset.pattern.permute.xlu0 0
    %385 = vperm.xlu0 %384, %v37
    %v386 = vpop.permute.xlu0 %385
    %389 = vset.pattern.permute.xlu0 0
    %390 = vperm.xlu0 %389, %v38
    %v391 = vpop.permute.xlu0 %390
    %v393 = vmul.f32 %v380, %v386
    %v394 = vmul.f32 %v382, %v391
    %v396 = vsel %vm360, %v393, 0
    %398 = vmatprep.subr.mxu0 0.0
    %399 = vmatpush1.msra.mxu0 0.0
    %400 = vmatprep.subr.mxu0 0.0
    %401 = vmatpush1.msra.mxu0 0.0
    %402 = vmatprep.subr.mxu0 0.0
    %403 = vmatpush1.msra.mxu0 0.0
    %404 = vmatprep.subr.mxu0 0.0
    %405 = vmatpush1.msra.mxu0 0.0
    %406 = vmatprep.subr.mxu0 0.0
    %407 = vmatpush1.msra.mxu0 0.0
    %408 = vmatprep.subr.mxu0 0.0
    %409 = vmatpush1.msra.mxu0 0.0
    %410 = vmatprep.subr.mxu0 0.0
    %411 = vmatpush1.msra.mxu0 0.0
    %412 = vmatprep.subr.mxu0 0.0
    %413 = vmatpush1.msra.mxu0 0.0
    %414 = vmatprep.subr.mxu0 0.0
    %415 = vmatpush1.msra.mxu0 0.0
    %416 = vmatprep.subr.mxu0 0.0
    %417 = vmatpush1.msra.mxu0 0.0
    %418 = vmatprep.subr.mxu0 0.0
    %419 = vmatpush1.msra.mxu0 0.0
    %420 = vmatprep.subr.mxu0 0.0
    %421 = vmatpush1.msra.mxu0 0.0
    %422 = vmatprep.subr.mxu0 0.0
    %423 = vmatpush1.msra.mxu0 0.0
    %424 = vmatprep.subr.mxu0 0.0
    %425 = vmatpush1.msra.mxu0 0.0
    %426 = vmatprep.subr.mxu0 0.0
    %427 = vmatpush1.msra.mxu0 0.0
    %428 = vmatprep.subr.mxu0 0.0
    %429 = vmatpush1.msra.mxu0 %v34
    %430 = vmatprep.subr.mxu0 0.0
    %431 = vmatpush2.msra.mxu0 0.0
    %432 = vmatprep.subr.mxu0 0.0
    %433 = vmatpush2.msra.mxu0 0.0
    %434 = vmatprep.subr.mxu0 0.0
    %435 = vmatpush2.msra.mxu0 0.0
    %436 = vmatprep.subr.mxu0 0.0
    %437 = vmatpush2.msra.mxu0 0.0
    %438 = vmatprep.subr.mxu0 0.0
    %439 = vmatpush2.msra.mxu0 0.0
    %440 = vmatprep.subr.mxu0 0.0
    %441 = vmatpush2.msra.mxu0 0.0
    %442 = vmatprep.subr.mxu0 0.0
    %443 = vmatpush2.msra.mxu0 0.0
    %444 = vmatprep.subr.mxu0 0.0
    %445 = vmatpush2.msra.mxu0 0.0
    %446 = vmatprep.subr.mxu0 0.0
    %447 = vmatpush2.msra.mxu0 0.0
    %448 = vmatprep.subr.mxu0 0.0
    %449 = vmatpush2.msra.mxu0 0.0
    %450 = vmatprep.subr.mxu0 0.0
    %451 = vmatpush2.msra.mxu0 0.0
    %452 = vmatprep.subr.mxu0 0.0
    %453 = vmatpush2.msra.mxu0 0.0
    %454 = vmatprep.subr.mxu0 0.0
    %455 = vmatpush2.msra.mxu0 0.0
    %456 = vmatprep.subr.mxu0 0.0
    %457 = vmatpush2.msra.mxu0 0.0
    %458 = vmatprep.subr.mxu0 0.0
    %459 = vmatpush2.msra.mxu0 0.0
    %460 = vmatprep.subr.mxu0 0.0
    %461 = vmatpush2.msra.mxu0 0.0
    %462 = vmatprep.mubr.f32.mxu0 0.0
    %463 = vmatmul.mubr.f32.gmra.mxu0 %v396
    %v464 = vpop.f32.mrf.mxu0
    %v465 = vadd.f32 0.0, %v464
    %v466 = vpop.f32.mrf.mxu0
    %467 = vdwg.mxu0
    %v469 = vsel %vm360, %v394, 0
    %471 = vmatprep.subr.mxu0 0.0
    %472 = vmatpush1.msra.mxu0 0.0
    %473 = vmatprep.subr.mxu0 0.0
    %474 = vmatpush1.msra.mxu0 0.0
    %475 = vmatprep.subr.mxu0 0.0
    %476 = vmatpush1.msra.mxu0 0.0
    %477 = vmatprep.subr.mxu0 0.0
    %478 = vmatpush1.msra.mxu0 0.0
    %479 = vmatprep.subr.mxu0 0.0
    %480 = vmatpush1.msra.mxu0 0.0
    %481 = vmatprep.subr.mxu0 0.0
    %482 = vmatpush1.msra.mxu0 0.0
    %483 = vmatprep.subr.mxu0 0.0
    %484 = vmatpush1.msra.mxu0 0.0
    %485 = vmatprep.subr.mxu0 0.0
    %486 = vmatpush1.msra.mxu0 0.0
    %487 = vmatprep.subr.mxu0 0.0
    %488 = vmatpush1.msra.mxu0 0.0
    %489 = vmatprep.subr.mxu0 0.0
    %490 = vmatpush1.msra.mxu0 0.0
    %491 = vmatprep.subr.mxu0 0.0
    %492 = vmatpush1.msra.mxu0 0.0
    %493 = vmatprep.subr.mxu0 0.0
    %494 = vmatpush1.msra.mxu0 0.0
    %495 = vmatprep.subr.mxu0 0.0
    %496 = vmatpush1.msra.mxu0 0.0
    %497 = vmatprep.subr.mxu0 0.0
    %498 = vmatpush1.msra.mxu0 0.0
    %499 = vmatprep.subr.mxu0 0.0
    %500 = vmatpush1.msra.mxu0 0.0
    %501 = vmatprep.subr.mxu0 0.0
    %502 = vmatpush1.msra.mxu0 %v35
    %503 = vmatprep.subr.mxu0 0.0
    %504 = vmatpush2.msra.mxu0 0.0
    %505 = vmatprep.subr.mxu0 0.0
    %506 = vmatpush2.msra.mxu0 0.0
    %507 = vmatprep.subr.mxu0 0.0
    %508 = vmatpush2.msra.mxu0 0.0
    %509 = vmatprep.subr.mxu0 0.0
    %510 = vmatpush2.msra.mxu0 0.0
    %511 = vmatprep.subr.mxu0 0.0
    %512 = vmatpush2.msra.mxu0 0.0
    %513 = vmatprep.subr.mxu0 0.0
    %514 = vmatpush2.msra.mxu0 0.0
    %515 = vmatprep.subr.mxu0 0.0
    %516 = vmatpush2.msra.mxu0 0.0
    %517 = vmatprep.subr.mxu0 0.0
    %518 = vmatpush2.msra.mxu0 0.0
    %519 = vmatprep.subr.mxu0 0.0
    %520 = vmatpush2.msra.mxu0 0.0
    %521 = vmatprep.subr.mxu0 0.0
    %522 = vmatpush2.msra.mxu0 0.0
    %523 = vmatprep.subr.mxu0 0.0
    %524 = vmatpush2.msra.mxu0 0.0
    %525 = vmatprep.subr.mxu0 0.0
    %526 = vmatpush2.msra.mxu0 0.0
    %527 = vmatprep.subr.mxu0 0.0
    %528 = vmatpush2.msra.mxu0 0.0
    %529 = vmatprep.subr.mxu0 0.0
    %530 = vmatpush2.msra.mxu0 0.0
    %531 = vmatprep.subr.mxu0 0.0
    %532 = vmatpush2.msra.mxu0 0.0
    %533 = vmatprep.subr.mxu0 0.0
    %534 = vmatpush2.msra.mxu0 0.0
    %535 = vmatprep.mubr.f32.mxu0 0.0
    %536 = vmatmul.mubr.f32.gmra.mxu0 %v469
    %v537 = vpop.f32.mrf.mxu0
    %v538 = vadd.f32 0.0, %v537
    %v539 = vpop.f32.mrf.mxu0
    %540 = vdwg.mxu0
    %v541 = vld [vmem:[%s6] sm:$0x1]
    %v543 = vlaneseq
    %v544 = vshrl.u32 %v543, 7
    %v545 = vsub.s32 0, %v544
    %v546 = vrot.slane %v541, %v545
    %v548 = vmul.f32 %v465, %v546
    %v549 = vmul.f32 %v538, %v546
    %v550 = vsel %vm47, %v548, 0.0
    %551 = vadd.xlane.f32.xlu0 %v550
    %v552 = vpop.xlane.xlu0 %551
    %v553 = vsel %vm47, %v549, 0.0
    %554 = vadd.xlane.f32.xlu0 %v553
    %v555 = vpop.xlane.xlu0 %554
    %556 = vst.msk [vmem:[%s7] sm:$0xff] %vm360, %v393
    %557 = vst.msk [vmem:[%s7 + $0x8] sm:$0xff] %vm360, %v394
    %558 = vst.msk [vmem:[%s8] sm:$0xff] %vm47, %v465
    %559 = vst.msk [vmem:[%s8 + $0x8] sm:$0xff] %vm47, %v538
    %v560 = vadd.f32 %v552, 0.0
    %v561 = vadd.f32 %v555, 0.0
    %v562 = vadd.f32 %v560, 0.0
    %v563 = vadd.f32 %v561, 0.0
    %v564 = vxor.u32 %v562, 2147483648
    %v565 = vxor.u32 %v563, 2147483648
    %v566 = vmul.f32 %v564, 1.442695
    %v567 = vpow.pop %v566
    %v568 = vmul.f32 %v565, 1.442695
    %v569 = vpow.pop %v568
    %v570 = vadd.f32 %v567, 1.0
    %v571 = vadd.f32 %v569, 1.0
    %v572 = vrcp.pop %v570
    %v573 = vmul.f32 1.0, %v572
    %v574 = vrcp.pop %v571
    %v575 = vmul.f32 1.0, %v574
    %v577 = vlaneseq
    %v578 = vshrl.u32 %v577, 7
    %v579 = vsub.s32 0, %v578
    %v580 = vrot.slane %v36, %v579
    %582 = vbcast.lane.b32.xlu0 %v580, 256
    %v583 = vpop.permute.xlu0 %582
    %v584 = vlaneseq
    %v585 = vshrl.u32 %v584, 7
    %v586 = vsub.s32 1, %v585
    %v587 = vrot.slane %v36, %v586
    %589 = vbcast.lane.b32.xlu0 %v587, 256
    %v590 = vpop.permute.xlu0 %589
    %v593 = vmul.f32 %v573, %v583
    %v594 = vmul.f32 %v575, %v590
    %v595 = vld [vmem:[%s4] sm:$0x3]
    %v597 = vlaneseq
    %v598 = vshrl.u32 %v597, 7
    %v599 = vsub.s32 0, %v598
    %v600 = vrot.slane %v595, %v599
    %602 = vbcast.lane.b32.xlu0 %v600, 256
    %v603 = vpop.permute.xlu0 %602
    %v604 = vlaneseq
    %v605 = vshrl.u32 %v604, 7
    %v606 = vsub.s32 1, %v605
    %v607 = vrot.slane %v595, %v606
    %609 = vbcast.lane.b32.xlu0 %v607, 256
    %v610 = vpop.permute.xlu0 %609
    %vm613 = vcmp.gt.f32.partialorder %v593, %v603
    %vm614 = vcmp.gt.f32.partialorder %v594, %v610
    %v615 = vsel %vm613, 1, 0
    %v616 = vsel %vm614, 1, 0
    %v617 = vcvt.s32.f32 %v615
    %v618 = vcvt.s32.f32 %v616
    %v619 = vadd.f32 %v617, 0.0
    %v620 = vadd.f32 %v618, 0.0
    %623 = vset.pattern.permute.xlu0 0
    %624 = vperm.xlu0 %623, %v593
    %v625 = vpop.permute.xlu0 %624
    %626 = vset.pattern.permute.xlu0 0
    %627 = vperm.xlu0 %626, %v594
    %v628 = vpop.permute.xlu0 %627
    %v629 = vlaneseq
    %v630 = vand.u32 %v629, 127
    %v631 = vlaneseq
    %v632 = vshrl.u32 %v631, 7
    %v633 = vsub.s32 %v630, %v632
    %v634 = vrot.slane %v625, %v633
    %v635 = vlaneseq
    %v636 = vshrl.u32 %v635, 7
    %v637 = vsub.s32 %v630, %v636
    %v638 = vrot.slane %v628, %v637
    %vm639 = vcmask 1041409
    %v640 = vsel %vm639, %v638, %v634
    %v642 = vsel %vm41, %v640, 0.0
    %643 = vadd.xlane.f32.xlu0 %v642
    %v644 = vpop.xlane.xlu0 %643
    %v645 = vrcp.pop %v45
    %v646 = vmul.f32 %v644, %v645
    %v648 = vlaneseq
    %v649 = vshrl.u32 %v648, 7
    %v650 = vsub.s32 0, %v649
    %v651 = vrot.slane %v646, %v650
    %v652 = vlaneseq
    %v653 = vshrl.u32 %v652, 7
    %v654 = vsub.s32 1, %v653
    %v655 = vrot.slane %v646, %v654
    %v658 = vsub.f32 %v593, %v651
    %v659 = vsub.f32 %v594, %v655
    %v660 = vmul.f32 %v658, %v583
    %v661 = vmul.f32 %v659, %v590
    %v662 = vmul.f32 %v660, %v660
    %v663 = vmul.f32 %v661, %v661
    %666 = vset.pattern.permute.xlu0 0
    %667 = vperm.xlu0 %666, %v662
    %v668 = vpop.permute.xlu0 %667
    %669 = vset.pattern.permute.xlu0 0
    %670 = vperm.xlu0 %669, %v663
    %v671 = vpop.permute.xlu0 %670
    %v672 = vlaneseq
    %v673 = vshrl.u32 %v672, 7
    %v674 = vsub.s32 %v630, %v673
    %v675 = vrot.slane %v668, %v674
    %v676 = vlaneseq
    %v677 = vshrl.u32 %v676, 7
    %v678 = vsub.s32 %v630, %v677
    %v679 = vrot.slane %v671, %v678
    %v680 = vsel %vm639, %v679, %v675
    %v682 = vsel %vm41, %v680, 0.0
    %683 = vadd.xlane.f32.xlu0 %v682
    %v684 = vpop.xlane.xlu0 %683
    %v685 = vmul.f32 %v684, %v645
    %v686 = vsel %vm51, %v685, 0.0
    %v687 = vrot.slane %v686, 4
    %v688 = vadd.f32 %v686, %v687
    %v689 = vrot.slane %v688, 2
    %v690 = vadd.f32 %v688, %v689
    %v691 = vrot.slane %v690, 1
    %v692 = vadd.f32 %v690, %v691
    %v693 = vrcp.pop 2.0
    %v694 = vmul.f32 %v692, %v693
    %v695 = vadd.f32 %v694, 0.0
    %v696 = vmul.f32 %v593, %v617
    %v697 = vmul.f32 %v594, %v618
    %v698 = vsub.f32 1.0, %v593
    %v699 = vsub.f32 1.0, %v594
    %v700 = vsub.f32 1.0, %v617
    %v701 = vsub.f32 1.0, %v618
    %v702 = vmul.f32 %v698, %v700
    %v703 = vmul.f32 %v699, %v701
    %v704 = vadd.f32 %v696, %v702
    %v705 = vadd.f32 %v697, %v703
    %vm706 = vcmp.gt.f32.partialorder %v36, 0.0
    %v707 = vadd.f32 %v704, 1e-06
    %v708 = vadd.f32 %v705, 1e-06
    %v709 = vlog2.pop %v707
    %v710 = vmul.f32 %v709, 0.6931472
    %v711 = vlog2.pop %v708
    %v712 = vmul.f32 %v711, 0.6931472
    %715 = vset.pattern.permute.xlu0 0
    %716 = vperm.xlu0 %715, %v710
    %v717 = vpop.permute.xlu0 %716
    %718 = vset.pattern.permute.xlu0 0
    %719 = vperm.xlu0 %718, %v712
    %v720 = vpop.permute.xlu0 %719
    %v721 = vlaneseq
    %v722 = vshrl.u32 %v721, 7
    %v723 = vsub.s32 %v630, %v722
    %v724 = vrot.slane %v717, %v723
    %v725 = vlaneseq
    %v726 = vshrl.u32 %v725, 7
    %v727 = vsub.s32 %v630, %v726
    %v728 = vrot.slane %v720, %v727
    %v729 = vsel %vm639, %v728, %v724
    %v731 = vsel %vm706, %v729, 0.0
    %v732 = vsel %vm41, %v731, 0.0
    %733 = vadd.xlane.f32.xlu0 %v732
    %v734 = vpop.xlane.xlu0 %733
    %v735 = vmul.f32 %v734, %v645
    %736 = vst.msk [vmem:[#allocation2] sm:$0x3] %vm41, %v640
    %vm737 = vcmask 1024
    %738 = vst.msk [vmem:[%s12] sm:$0x3] %vm737, %v735
    %v739 = vmul.f32 %v619, 0.1
    %v740 = vmul.f32 %v620, 0.1
    %v741 = vadd.f32 %v552, %v739
    %v742 = vadd.f32 %v555, %v740
    %v743 = vadd.f32 %v741, 0.1
    %v744 = vadd.f32 %v742, 0.1
    %v745 = vxor.u32 %v743, 2147483648
    %v746 = vxor.u32 %v744, 2147483648
    %v747 = vmul.f32 %v745, 1.442695
    %v748 = vpow.pop %v747
    %v749 = vmul.f32 %v746, 1.442695
    %v750 = vpow.pop %v749
    %v751 = vadd.f32 %v748, 1.0
    %v752 = vadd.f32 %v750, 1.0
    %v753 = vrcp.pop %v751
    %v754 = vmul.f32 1.0, %v753
    %v755 = vrcp.pop %v752
    %v756 = vmul.f32 1.0, %v755
    %v757 = vmul.f32 %v754, %v583
    %v758 = vmul.f32 %v756, %v590
    %s759 = scalar_lea.vmem %s4, 2
    %v760 = vld [vmem:[%s759] sm:$0x3]
    %v762 = vlaneseq
    %v763 = vshrl.u32 %v762, 7
    %v764 = vsub.s32 0, %v763
    %v765 = vrot.slane %v760, %v764
    %767 = vbcast.lane.b32.xlu0 %v765, 256
    %v768 = vpop.permute.xlu0 %767
    %v769 = vlaneseq
    %v770 = vshrl.u32 %v769, 7
    %v771 = vsub.s32 1, %v770
    %v772 = vrot.slane %v760, %v771
    %774 = vbcast.lane.b32.xlu0 %v772, 256
    %v775 = vpop.permute.xlu0 %774
    %vm778 = vcmp.gt.f32.partialorder %v757, %v768
    %vm779 = vcmp.gt.f32.partialorder %v758, %v775
    %v780 = vsel %vm778, 1, 0
    %v781 = vsel %vm779, 1, 0
    %v782 = vcvt.s32.f32 %v780
    %v783 = vcvt.s32.f32 %v781
    %v784 = vmul.f32 %v619, 2.0
    %v785 = vmul.f32 %v620, 2.0
    %v786 = vadd.f32 %v784, %v782
    %v787 = vadd.f32 %v785, %v783
    %790 = vset.pattern.permute.xlu0 0
    %791 = vperm.xlu0 %790, %v757
    %v792 = vpop.permute.xlu0 %791
    %793 = vset.pattern.permute.xlu0 0
    %794 = vperm.xlu0 %793, %v758
    %v795 = vpop.permute.xlu0 %794
    %v796 = vlaneseq
    %v797 = vshrl.u32 %v796, 7
    %v798 = vsub.s32 %v630, %v797
    %v799 = vrot.slane %v792, %v798
    %v800 = vlaneseq
    %v801 = vshrl.u32 %v800, 7
    %v802 = vsub.s32 %v630, %v801
    %v803 = vrot.slane %v795, %v802
    %v804 = vsel %vm639, %v803, %v799
    %v806 = vsel %vm41, %v804, 0.0
    %807 = vadd.xlane.f32.xlu0 %v806
    %v808 = vpop.xlane.xlu0 %807
    %v809 = vmul.f32 %v808, %v645
    %v811 = vlaneseq
    %v812 = vshrl.u32 %v811, 7
    %v813 = vsub.s32 0, %v812
    %v814 = vrot.slane %v809, %v813
    %v815 = vlaneseq
    %v816 = vshrl.u32 %v815, 7
    %v817 = vsub.s32 1, %v816
    %v818 = vrot.slane %v809, %v817
    %v821 = vsub.f32 %v757, %v814
    %v822 = vsub.f32 %v758, %v818
    %v823 = vmul.f32 %v821, %v583
    %v824 = vmul.f32 %v822, %v590
    %v825 = vmul.f32 %v823, %v823
    %v826 = vmul.f32 %v824, %v824
    %829 = vset.pattern.permute.xlu0 0
    %830 = vperm.xlu0 %829, %v825
    %v831 = vpop.permute.xlu0 %830
    %832 = vset.pattern.permute.xlu0 0
    %833 = vperm.xlu0 %832, %v826
    %v834 = vpop.permute.xlu0 %833
    %v835 = vlaneseq
    %v836 = vshrl.u32 %v835, 7
    %v837 = vsub.s32 %v630, %v836
    %v838 = vrot.slane %v831, %v837
    %v839 = vlaneseq
    %v840 = vshrl.u32 %v839, 7
    %v841 = vsub.s32 %v630, %v840
    %v842 = vrot.slane %v834, %v841
    %v843 = vsel %vm639, %v842, %v838
    %v845 = vsel %vm41, %v843, 0.0
    %846 = vadd.xlane.f32.xlu0 %v845
    %v847 = vpop.xlane.xlu0 %846
    %v848 = vmul.f32 %v847, %v645
    %v849 = vsel %vm51, %v848, 0.0
    %v850 = vrot.slane %v849, 4
    %v851 = vadd.f32 %v849, %v850
    %v852 = vrot.slane %v851, 2
    %v853 = vadd.f32 %v851, %v852
    %v854 = vrot.slane %v853, 1
    %v855 = vadd.f32 %v853, %v854
    %v856 = vmul.f32 %v855, %v693
    %v857 = vadd.f32 %v695, %v856
    %v858 = vmul.f32 %v757, %v782
    %v859 = vmul.f32 %v758, %v783
    %v860 = vsub.f32 1.0, %v757
    %v861 = vsub.f32 1.0, %v758
    %v862 = vsub.f32 1.0, %v782
    %v863 = vsub.f32 1.0, %v783
    %v864 = vmul.f32 %v860, %v862
    %v865 = vmul.f32 %v861, %v863
    %v866 = vadd.f32 %v858, %v864
    %v867 = vadd.f32 %v859, %v865
    %v868 = vadd.f32 %v866, 1e-06
    %v869 = vadd.f32 %v867, 1e-06
    %v870 = vlog2.pop %v868
    %v871 = vmul.f32 %v870, 0.6931472
    %v872 = vlog2.pop %v869
    %v873 = vmul.f32 %v872, 0.6931472
    %876 = vset.pattern.permute.xlu0 0
    %877 = vperm.xlu0 %876, %v871
    %v878 = vpop.permute.xlu0 %877
    %879 = vset.pattern.permute.xlu0 0
    %880 = vperm.xlu0 %879, %v873
    %v881 = vpop.permute.xlu0 %880
    %v882 = vlaneseq
    %v883 = vshrl.u32 %v882, 7
    %v884 = vsub.s32 %v630, %v883
    %v885 = vrot.slane %v878, %v884
    %v886 = vlaneseq
    %v887 = vshrl.u32 %v886, 7
    %v888 = vsub.s32 %v630, %v887
    %v889 = vrot.slane %v881, %v888
    %v890 = vsel %vm639, %v889, %v885
    %v892 = vsel %vm706, %v890, 0.0
    %v893 = vsel %vm41, %v892, 0.0
    %894 = vadd.xlane.f32.xlu0 %v893
    %v895 = vpop.xlane.xlu0 %894
    %v896 = vmul.f32 %v895, %v645
    %s897 = scalar_lea.vmem [#allocation2], 2
    %898 = vst.msk [vmem:[%s897] sm:$0x3] %vm41, %v804
    %s899 = scalar_lea.vmem %s12, 2
    %900 = vst.msk [vmem:[%s899] sm:$0x3] %vm737, %v896
    %v901 = vmul.f32 %v786, %v583
    %v902 = vmul.f32 %v787, %v590
    %v903 = vsub.f32 1.0, %v36
    %v904 = vmul.f32 %v903, 1000000.0
    %v906 = vlaneseq
    %v907 = vshrl.u32 %v906, 7
    %v908 = vsub.s32 0, %v907
    %v909 = vrot.slane %v904, %v908
    %911 = vbcast.lane.b32.xlu0 %v909, 256
    %v912 = vpop.permute.xlu0 %911
    %v913 = vlaneseq
    %v914 = vshrl.u32 %v913, 7
    %v915 = vsub.s32 1, %v914
    %v916 = vrot.slane %v904, %v915
    %918 = vbcast.lane.b32.xlu0 %v916, 256
    %v919 = vpop.permute.xlu0 %918
    %v922 = vadd.f32 %v901, %v912
    %v923 = vadd.f32 %v902, %v919
    %926 = vset.pattern.permute.xlu0 0
    %927 = vperm.xlu0 %926, %v922
    %v928 = vpop.permute.xlu0 %927
    %929 = vset.pattern.permute.xlu0 0
    %930 = vperm.xlu0 %929, %v923
    %v931 = vpop.permute.xlu0 %930
    %v932 = vlaneseq
    %v933 = vshrl.u32 %v932, 7
    %v934 = vsub.s32 %v630, %v933
    %v935 = vrot.slane %v928, %v934
    %v936 = vlaneseq
    %v937 = vshrl.u32 %v936, 7
    %v938 = vsub.s32 %v630, %v937
    %v939 = vrot.slane %v931, %v938
    %v940 = vsel %vm639, %v939, %v935
    %942 = vst.msk [vmem:[#allocation4] sm:$0x3] %vm41, %v940
    %vm943 = vcmask 0
    %944 = vst.msk [vmem:[#allocation6] sm:$0x1] %vm943, %v857
    // Predicated region
    $region30: #{dcn_forward.3} parent=1 // pred_check
      _
    $region31: #{dcn_forward.3} parent=1 // pred_check_branch
      %946 = sbr.rel (0) target = $region33
    $region32: #{dcn_forward.3} parent=1 // pred_region
      _
    $region33: #{dcn_forward.3} parent=1 // pred_fallthru
      _
    // Predicated region
    $region34: #{dcn_forward.3} parent=1 // pred_check
      _
    $region35: #{dcn_forward.3} parent=1 // pred_check_branch
      %948 = sbr.rel (0) target = $region37
    $region36: #{dcn_forward.3} parent=1 // pred_region
      _
    $region37: #{dcn_forward.3} parent=1 // pred_fallthru
      _
    // Predicated region
    $region38: #{dcn_forward.3} parent=1 // pred_check
      _
    $region39: #{dcn_forward.3} parent=1 // pred_check_branch
      %950 = sbr.rel (0) target = $region41
    $region40: #{dcn_forward.3} parent=1 // pred_region
      %s952 = ssub.s32 64, 64
      %953 = vsyncadd [#allocation3], %s952
      %s954 = sshll.u32 [#allocation2], 4
      %s955 = int_to_ptr.vmem [resolvable:$true] %s954
      %960 = dma.vmem_to_hbm [thread:$0]  %s955, 64, %s9, [#allocation3], 32, 32, 2
    $region41: #{dcn_forward.3} parent=1 // pred_fallthru
      _
    // Predicated region
    $region42: #{dcn_forward.3} parent=1 // pred_check
      _
    $region43: #{dcn_forward.3} parent=1 // pred_check_branch
      %962 = sbr.rel (0) target = $region45
    $region44: #{dcn_forward.3} parent=1 // pred_region
      %s964 = ssub.s32 32, 32
      %965 = vsyncadd [#allocation5], %s964
      %s967 = sshll.u32 [#allocation4], 4
      %s968 = int_to_ptr.vmem [resolvable:$true] %s967
      %970 = dma.vmem_to_hbm [thread:$0]  %s968, 32, %s10, [#allocation5]
    $region45: #{dcn_forward.3} parent=1 // pred_fallthru
      _
    // Predicated region
    $region46: #{dcn_forward.3} parent=1 // pred_check
      _
    $region47: #{dcn_forward.3} parent=1 // pred_check_branch
      %972 = sbr.rel (0) target = $region49
    $region48: #{dcn_forward.3} parent=1 // pred_region
      %s974 = ssub.s32 16, 16
      %975 = vsyncadd [#allocation5], %s974
      %s977 = sshll.u32 [#allocation6], 4
      %s978 = int_to_ptr.vmem [resolvable:$true] %s977
      %980 = dma.vmem_to_hbm [thread:$0]  %s978, 16, %s11, [#allocation5]
    $region49: #{dcn_forward.3} parent=1 // pred_fallthru
      _
    // Predicated region
    $region50: #{dcn_forward.3} parent=1 // pred_check
      _
    $region51: #{dcn_forward.3} parent=1 // pred_check_branch
      %982 = sbr.rel (0) target = $region53
    $region52: #{dcn_forward.3} parent=1 // pred_region
      _
    $region53: #{dcn_forward.3} parent=1 // pred_fallthru
      _
    // Predicated region
    $region54: #{dcn_forward.3} parent=1 // pred_check
      _
    $region55: #{dcn_forward.3} parent=1 // pred_check_branch
      %984 = sbr.rel (0) target = $region57
    $region56: #{dcn_forward.3} parent=1 // pred_region
      _
    $region57: #{dcn_forward.3} parent=1 // pred_fallthru
      _
    // Predicated region
    $region58: #{dcn_forward.3} parent=1 // pred_check
      _
    $region59: #{dcn_forward.3} parent=1 // pred_check_branch
      %986 = sbr.rel (0) target = $region61
    $region60: #{dcn_forward.3} parent=1 // pred_region
      _
    $region61: #{dcn_forward.3} parent=1 // pred_fallthru
      _
    // Predicated region
    $region62: #{dcn_forward.3} parent=1 // pred_check
      _
    $region63: #{dcn_forward.3} parent=1 // pred_check_branch
      %988 = sbr.rel (0) target = $region65
    $region64: #{dcn_forward.3} parent=1 // pred_region
      %989 = dma.done [#allocation3], 64
    $region65: #{dcn_forward.3} parent=1 // pred_fallthru
      _
    // Predicated region
    $region66: #{dcn_forward.3} parent=1 // pred_check
      _
    $region67: #{dcn_forward.3} parent=1 // pred_check_branch
      %991 = sbr.rel (0) target = $region69
    $region68: #{dcn_forward.3} parent=1 // pred_region
      %992 = dma.done [#allocation5], 32
    $region69: #{dcn_forward.3} parent=1 // pred_fallthru
      _
    // Predicated region
    $region70: #{dcn_forward.3} parent=1 // pred_check
      _
    $region71: #{dcn_forward.3} parent=1 // pred_check_branch
      %994 = sbr.rel (0) target = $region73
    $region72: #{dcn_forward.3} parent=1 // pred_region
      %995 = dma.done [#allocation5], 16
    $region73: #{dcn_forward.3} parent=1 // pred_fallthru
      _
    // Predicated region
    $region74: #{dcn_forward.3} parent=1 // pred_check
      _
    $region75: #{dcn_forward.3} parent=1 // pred_check_branch
      %997 = sbr.rel (0) target = $region77
    $region76: #{dcn_forward.3} parent=1 // pred_region
      _
    $region77: #{dcn_forward.3} parent=1 // pred_fallthru
      _
    %998 = vsyncpa [#allocation3], 1
    %999 = vsyncpa [#allocation5], 1

</llo_original>
